<compile_context>
chip_gen: v6e
topology: v6e:2x2x1
jax: 0.10.0
libtpu: 0.0.40
codegen_flags: <defaults>
</compile_context>

<pallas_src>
import functools
import math

import jax
import jax.numpy as jnp
from jax import lax
from jax.experimental import pallas as pl
from jax.experimental.pallas import tpu as pltpu


# ----------------------------------------------------------------------------
# Pallas kernel: fused bidirectional LSTM recurrence over chunks of timesteps.
# grid = (num_dirs, T // TS)
# ----------------------------------------------------------------------------
def _make_bidir_lstm_kernel(TS, H):
    G = 4 * H

    def kernel(gx_ref, whh_hbm, y_ref, w_vmem, w_sem, h_sc, c_sc):
        d = pl.program_id(0)       # direction (0 = forward, 1 = backward)
        tc = pl.program_id(1)      # time chunk, in kernel-time order

        # Once per direction: pin this direction's W_hh^T in VMEM (single
        # buffered, no BlockSpec double buffering) and reset recurrent state.
        @pl.when(tc == 0)
        def _():
            cp = pltpu.make_async_copy(whh_hbm.at[d], w_vmem, w_sem)
            cp.start()
            cp.wait()
            h_sc[...] = jnp.zeros_like(h_sc)
            c_sc[...] = jnp.zeros_like(c_sc)

        w_hh = w_vmem[...]                                   # (H, 4H) bf16

        # Per-lane constants so ONE tanh over the whole lane-dense (B, 4H)
        # tile yields the right activation per gate:
        #   sigmoid(z) = 0.5*tanh(0.5 z) + 0.5   for i, f, o lanes
        #   tanh(z)                              for g lanes
        lane = lax.broadcasted_iota(jnp.int32, (1, G), 1)
        is_g = (lane >= 2 * H) & (lane < 3 * H)
        c1 = jnp.where(is_g, 1.0, 0.5).astype(jnp.float32)
        c0 = jnp.where(is_g, 0.0, 0.5).astype(jnp.float32)

        def step(s, carry):
            h, c = carry
            # forward walks the chunk 0..TS-1, backward TS-1..0
            s_eff = jnp.where(d == 0, s, TS - 1 - s)
            gx = gx_ref[0, s_eff]                            # (Bp, 4H) f32
            gates = gx + jnp.dot(h.astype(jnp.bfloat16), w_hh,
                                 preferred_element_type=jnp.float32)
            act = c1 * jnp.tanh(c1 * gates) + c0             # one EUP tanh
            i_g = act[:, 0 * H:1 * H]
            f_g = act[:, 1 * H:2 * H]
            g_g = act[:, 2 * H:3 * H]
            o_g = act[:, 3 * H:4 * H]
            c_new = f_g * c + i_g * g_g
            h_new = o_g * jnp.tanh(c_new)
            y_ref[0, s_eff] = h_new.astype(y_ref.dtype)
            return h_new, c_new

        h, c = lax.fori_loop(0, TS, step, (h_sc[...], c_sc[...]), unroll=True)
        h_sc[...] = h
        c_sc[...] = c

    return kernel


def _bidir_lstm_recurrence(gates_x, w_hh_t, *, TS):
    """gates_x: (nd, T, Bp, 4H) f32 (bias already folded in, NOT time-reversed)
    w_hh_t:   (nd, H, 4H) bf16
    Returns (nd, T, Bp, H) f32, both directions in natural time order."""
    nd, T, Bp, G = gates_x.shape
    H = G // 4
    C = T // TS

    def block_idx(d, tc):
        # forward: chunk tc; backward: chunk C-1-tc (within-chunk reversal is
        # done inside the kernel), so outputs are written in natural order.
        t_blk = (1 - d) * tc + d * (C - 1 - tc)
        return (d, t_blk, 0, 0)

    return pl.pallas_call(
        _make_bidir_lstm_kernel(TS, H),
        out_shape=jax.ShapeDtypeStruct((nd, T, Bp, H), jnp.float32),
        grid_spec=pltpu.PrefetchScalarGridSpec(
            num_scalar_prefetch=0,
            grid=(nd, C),
            in_specs=[
                pl.BlockSpec((1, TS, Bp, G), block_idx),     # precomputed x-gates
                pl.BlockSpec(memory_space=pl.ANY),           # W_hh^T stays in HBM
            ],
            out_specs=pl.BlockSpec((1, TS, Bp, H), block_idx),
            scratch_shapes=[
                pltpu.VMEM((H, G), jnp.bfloat16),            # pinned W_hh^T
                pltpu.SemaphoreType.DMA(()),                 # its DMA semaphore
                pltpu.VMEM((Bp, H), jnp.float32),            # h state
                pltpu.VMEM((Bp, H), jnp.float32),            # c state
            ],
        ),
        compiler_params=pltpu.CompilerParams(
            # direction axis -> one TensorCore per direction on v7x; the time
            # axis carries the recurrence and must stay sequential.
            dimension_semantics=("parallel", "arbitrary"),
            vmem_limit_bytes=48 * 1024 * 1024,   # stays within v7x's 64 MiB VMEM
        ),
    )(gates_x, w_hh_t)


# ----------------------------------------------------------------------------
# Parameters (PyTorch-style) + one-time preparation (transpose / bf16 / bias).
# ----------------------------------------------------------------------------
def init_muff_ner_params(key, input_dim, hidden_dim, num_layers, bidirectional=True):
    """PyTorch nn.LSTM shapes: W_ih (4H, D_l), W_hh (4H, H), b_* (4H,)."""
    num_dirs = 2 if bidirectional else 1
    bound = 1.0 / math.sqrt(hidden_dim)
    params = {}
    for layer in range(num_layers):
        d_in = input_dim if layer == 0 else hidden_dim * num_dirs
        for direction in range(num_dirs):
            key, k1, k2, k3, k4 = jax.random.split(key, 5)
            params[(layer, direction)] = dict(
                w_ih=jax.random.uniform(k1, (4 * hidden_dim, d_in),
                                        jnp.float32, -bound, bound),
                w_hh=jax.random.uniform(k2, (4 * hidden_dim, hidden_dim),
                                        jnp.float32, -bound, bound),
                b_ih=jax.random.uniform(k3, (4 * hidden_dim,),
                                        jnp.float32, -bound, bound),
                b_hh=jax.random.uniform(k4, (4 * hidden_dim,),
                                        jnp.float32, -bound, bound),
            )
    return params


def prepare_muff_ner_params(params, num_layers, bidirectional=True):
    """One-time prep: stack directions, transpose to (D,4H)/(H,4H), cast weights
    to bf16, fold b_ih + b_hh. Done once, NOT on every forward call."""
    num_dirs = 2 if bidirectional else 1
    prepared = []
    for layer in range(num_layers):
        w_ih_t = jnp.stack([params[(layer, d)]["w_ih"].T
                            for d in range(num_dirs)]).astype(jnp.bfloat16)
        w_hh_t = jnp.stack([params[(layer, d)]["w_hh"].T
                            for d in range(num_dirs)]).astype(jnp.bfloat16)
        bias = jnp.stack([params[(layer, d)]["b_ih"] + params[(layer, d)]["b_hh"]
                          for d in range(num_dirs)]).astype(jnp.float32)
        prepared.append(dict(w_ih_t=w_ih_t, w_hh_t=w_hh_t, bias=bias))
    return prepared


# ----------------------------------------------------------------------------
# Forward pass (MuffNermodel.forward equivalent).
# ----------------------------------------------------------------------------
def _pick_time_chunk(T, max_chunk=32):
    for ts in range(min(T, max_chunk), 0, -1):
        if T % ts == 0:
            return ts
    return 1


@functools.partial(jax.jit, static_argnames=("time_chunk",))
def muff_ner_forward(x_btd, prepared, *, time_chunk=32):
    """x_btd: (B, T, input_dim) -> (B, T, num_dirs*hidden_dim)."""
    B, T, _ = x_btd.shape
    TS = _pick_time_chunk(T, time_chunk)
    Bp = ((B + 7) // 8) * 8                      # pad batch to sublane multiple

    x = jnp.transpose(x_btd, (1, 0, 2)).astype(jnp.float32)   # time-major (T, B, D)
    if Bp != B:
        x = jnp.pad(x, ((0, 0), (0, Bp - B), (0, 0)))

    for lp in prepared:
        w_ih_t, w_hh_t, bias = lp["w_ih_t"], lp["w_hh_t"], lp["bias"]
        nd = w_ih_t.shape[0]

        # Hoisted input projection: one big bf16 MXU matmul over all T*Bp rows.
        gx = jnp.einsum("tbd,zdg->ztbg", x.astype(jnp.bfloat16), w_ih_t,
                        preferred_element_type=jnp.float32)
        gx = gx + bias[:, None, None, :]                       # (nd, T, Bp, 4H)

        y = _bidir_lstm_recurrence(gx, w_hh_t, TS=TS)          # (nd, T, Bp, H)

        x = (jnp.concatenate([y[i] for i in range(nd)], axis=-1)
             if nd > 1 else y[0])                              # (T, Bp, nd*H)

    out = jnp.transpose(x, (1, 0, 2))[:B]        # crop batch padding -> (B, T, nd*H)
    # self.drop (Dropout p=0.5): identity at inference (eval mode).
    return out


# ----------------------------------------------------------------------------
# Pure-JAX reference (lax.scan) emulating the kernel's bf16-operand /
# f32-accumulate precision, for a correctness check.
# ----------------------------------------------------------------------------
def _lstm_ref(x_btd, prepared, hidden_dim):
    H = hidden_dim
    x = x_btd.astype(jnp.float32)
    B = x.shape[0]

    def one_dir(x_seq, w_ih_t, w_hh_t, b, reverse):
        w_ih = w_ih_t.astype(jnp.float32)        # (D, 4H), bf16 values
        w_hh = w_hh_t.astype(jnp.float32)        # (H, 4H), bf16 values

        def step(carry, x_t):
            h, c = carry
            gates = (x_t.astype(jnp.bfloat16).astype(jnp.float32) @ w_ih
                     + h.astype(jnp.bfloat16).astype(jnp.float32) @ w_hh + b)
            i, f, g, o = jnp.split(gates, 4, axis=-1)
            i, f, o = jax.nn.sigmoid(i), jax.nn.sigmoid(f), jax.nn.sigmoid(o)
            g = jnp.tanh(g)
            c = f * c + i * g
            h = o * jnp.tanh(c)
            return (h, c), h

        h0 = jnp.zeros((B, H), jnp.float32)
        c0 = jnp.zeros((B, H), jnp.float32)
        xs = jnp.transpose(x_seq, (1, 0, 2))
        if reverse:
            xs = xs[::-1]
        _, ys = lax.scan(step, (h0, c0), xs)
        if reverse:
            ys = ys[::-1]
        return jnp.transpose(ys, (1, 0, 2))

    for lp in prepared:
        nd = lp["w_ih_t"].shape[0]
        outs = [one_dir(x, lp["w_ih_t"][d], lp["w_hh_t"][d], lp["bias"][d], d == 1)
                for d in range(nd)]
        x = jnp.concatenate(outs, axis=-1)
    return x


if __name__ == "__main__":
    # Small shapes consistent with the module.
    B, T = 2, 8
    input_dim, hidden_dim, num_layer = 32, 32, 2

    key = jax.random.PRNGKey(0)
    key, xkey = jax.random.split(key)
    x = jax.random.normal(xkey, (B, T, input_dim), dtype=jnp.float32)

    params = init_muff_ner_params(key, input_dim, hidden_dim, num_layer,
                                  bidirectional=True)
    prepared = prepare_muff_ner_params(params, num_layer, bidirectional=True)

    out = muff_ner_forward(x, prepared)
    out = jax.block_until_ready(out)

    ref = _lstm_ref(x, prepared, hidden_dim)
    assert out.shape == (B, T, 2 * hidden_dim), out.shape
    assert jnp.allclose(out, ref, rtol=2e-3, atol=2e-3), (
        "mismatch vs reference, max abs diff = %f"
        % float(jnp.max(jnp.abs(out - ref))))

    print("KERNEL_OK")
</pallas_src>

<mosaic_0001>
module attributes {stable_mosaic.version = 11 : i64} {
  func.func @kernel(%arg0: i32, %arg1: i32, %arg2: memref<1x8x8x128xf32, #tpu.memory_space<vmem>>, %arg3: memref<2x32x128xbf16, #tpu.memory_space<any>>, %arg4: memref<1x8x8x32xf32, #tpu.memory_space<vmem>>, %arg5: memref<32x128xbf16, #tpu.memory_space<vmem>>, %arg6: memref<!tpu.dma_semaphore, #tpu.memory_space<semaphore_mem>>, %arg7: memref<8x32xf32, #tpu.memory_space<vmem>>, %arg8: memref<8x32xf32, #tpu.memory_space<vmem>>) attributes {dimension_semantics = [#tpu.dimension_semantics<parallel>, #tpu.dimension_semantics<arbitrary>], iteration_bounds = array<i64: 2, 1>, scalar_prefetch = 0 : i64, scratch_operands = 4 : i64, tpu.core_type = #tpu.core_type<tc>, window_params = [{transform_indices = @transform_0, window_bounds = array<i64: 1, 8, 8, 128>}, {}, {transform_indices = @transform_2, window_bounds = array<i64: 1, 8, 8, 32>}]} {
    %c0_i32 = arith.constant 0 : i32
    %0 = arith.cmpi eq, %arg1, %c0_i32 : i32
    %1 = arith.extui %0 : i1 to i32
    %c0_i32_0 = arith.constant 0 : i32
    %2 = arith.cmpi ne, %1, %c0_i32_0 : i32
    scf.if %2 {
      %c0_i32_86 = arith.constant 0 : i32
      %c0_i32_87 = arith.constant 0 : i32
      %252 = tpu.memref_slice %arg3[%arg0, %c0_i32_86, %c0_i32_87] : memref<2x32x128xbf16, #tpu.memory_space<any>> -> memref<1x32x128xbf16, #tpu.memory_space<any>>
      %253 = tpu.memref_squeeze %252 : memref<1x32x128xbf16, #tpu.memory_space<any>> -> memref<32x128xbf16, #tpu.memory_space<any>>
      tpu.enqueue_dma source(%253 : memref<32x128xbf16, #tpu.memory_space<any>>) target(%arg5 : memref<32x128xbf16, #tpu.memory_space<vmem>>) target_semaphore(%arg6 : memref<!tpu.dma_semaphore, #tpu.memory_space<semaphore_mem>>)
      %c0_i32_88 = arith.constant 0 : i32
      %c0_i32_89 = arith.constant 0 : i32
      %254 = tpu.memref_slice %arg3[%arg0, %c0_i32_88, %c0_i32_89] : memref<2x32x128xbf16, #tpu.memory_space<any>> -> memref<1x32x128xbf16, #tpu.memory_space<any>>
      %255 = tpu.memref_squeeze %254 : memref<1x32x128xbf16, #tpu.memory_space<any>> -> memref<32x128xbf16, #tpu.memory_space<any>>
      tpu.wait_dma2 semaphore(%arg6 : memref<!tpu.dma_semaphore, #tpu.memory_space<semaphore_mem>>) src(%255 : memref<32x128xbf16, #tpu.memory_space<any>>) dst(%arg5 : memref<32x128xbf16, #tpu.memory_space<vmem>>)
      %cst_90 = arith.constant 0.000000e+00 : f32
      %256 = vector.broadcast %cst_90 : f32 to vector<8x32xf32>
      %c0_91 = arith.constant 0 : index
      %c0_92 = arith.constant 0 : index
      %257 = vector.load %arg7[%c0_91, %c0_92] : memref<8x32xf32, #tpu.memory_space<vmem>>, vector<8x32xf32>
      tpu.vector_store %arg7[%c0_91, %c0_92], %256 {strides = array<i32>} : memref<8x32xf32, #tpu.memory_space<vmem>>, vector<8x32xf32>,
      %cst_93 = arith.constant 0.000000e+00 : f32
      %258 = vector.broadcast %cst_93 : f32 to vector<8x32xf32>
      %c0_94 = arith.constant 0 : index
      %c0_95 = arith.constant 0 : index
      %259 = vector.load %arg8[%c0_94, %c0_95] : memref<8x32xf32, #tpu.memory_space<vmem>>, vector<8x32xf32>
      tpu.vector_store %arg8[%c0_94, %c0_95], %258 {strides = array<i32>} : memref<8x32xf32, #tpu.memory_space<vmem>>, vector<8x32xf32>,
    } else {
    }
    %c0 = arith.constant 0 : index
    %c0_1 = arith.constant 0 : index
    %3 = vector.load %arg5[%c0, %c0_1] : memref<32x128xbf16, #tpu.memory_space<vmem>>, vector<32x128xbf16>
    %4 = tpu.iota {dimensions = array<i32: 1>} : vector<1x128xi32>
    %c64_i32 = arith.constant 64 : i32
    %5 = vector.broadcast %c64_i32 : i32 to vector<1x128xi32>
    %6 = arith.cmpi sge, %4, %5 : vector<1x128xi32>
    %c96_i32 = arith.constant 96 : i32
    %7 = vector.broadcast %c96_i32 : i32 to vector<1x128xi32>
    %8 = arith.cmpi slt, %4, %7 : vector<1x128xi32>
    %9 = arith.andi %6, %8 : vector<1x128xi1>
    %cst = arith.constant 1.000000e+00 : f32
    %cst_2 = arith.constant 5.000000e-01 : f32
    %10 = vector.broadcast %cst : f32 to vector<1x128xf32>
    %11 = vector.broadcast %cst_2 : f32 to vector<1x128xf32>
    %12 = arith.select %9, %10, %11 : vector<1x128xi1>, vector<1x128xf32>
    %cst_3 = arith.constant 0.000000e+00 : f32
    %cst_4 = arith.constant 5.000000e-01 : f32
    %13 = vector.broadcast %cst_3 : f32 to vector<1x128xf32>
    %14 = vector.broadcast %cst_4 : f32 to vector<1x128xf32>
    %15 = arith.select %9, %13, %14 : vector<1x128xi1>, vector<1x128xf32>
    %c0_5 = arith.constant 0 : index
    %c0_6 = arith.constant 0 : index
    %16 = vector.load %arg7[%c0_5, %c0_6] : memref<8x32xf32, #tpu.memory_space<vmem>>, vector<8x32xf32>
    %c0_7 = arith.constant 0 : index
    %c0_8 = arith.constant 0 : index
    %17 = vector.load %arg8[%c0_7, %c0_8] : memref<8x32xf32, #tpu.memory_space<vmem>>, vector<8x32xf32>
    %c0_i32_9 = arith.constant 0 : i32
    %c0_i32_10 = arith.constant 0 : i32
    %18 = arith.cmpi eq, %arg0, %c0_i32_10 : i32
    %c7_i32 = arith.constant 7 : i32
    %19 = arith.subi %c7_i32, %c0_i32_9 : i32
    %20 = arith.select %18, %c0_i32_9, %19 : i32
    %c0_11 = arith.constant 0 : index
    %21 = arith.index_cast %20 : i32 to index
    %c0_12 = arith.constant 0 : index
    %c0_13 = arith.constant 0 : index
    %22 = vector.load %arg2[%c0_11, %21, %c0_12, %c0_13] : memref<1x8x8x128xf32, #tpu.memory_space<vmem>>, vector<1x1x8x128xf32>
    %23 = vector.shape_cast %22 : vector<1x1x8x128xf32> to vector<8x128xf32>
    %24 = arith.truncf %16 : vector<8x32xf32> to vector<8x32xbf16>
    %cst_14 = arith.constant dense<0.000000e+00> : vector<8x128xf32>
    %25 = tpu.matmul %24, %3, %cst_14 {dimension_numbers = #tpu.dot_dimension_numbers<[1], [0], [0], [1], [0, 0, 1, 1], [], []>} : vector<8x32xbf16>, vector<32x128xbf16>, vector<8x128xf32> -> vector<8x128xf32>
    %26 = arith.addf %23, %25 : vector<8x128xf32>
    %27 = vector.broadcast %12 : vector<1x128xf32> to vector<8x128xf32>
    %28 = arith.mulf %27, %26 : vector<8x128xf32>
    %29 = math.tanh %28 : vector<8x128xf32>
    %30 = vector.broadcast %12 : vector<1x128xf32> to vector<8x128xf32>
    %31 = arith.mulf %30, %29 : vector<8x128xf32>
    %32 = vector.broadcast %15 : vector<1x128xf32> to vector<8x128xf32>
    %33 = arith.addf %31, %32 : vector<8x128xf32>
    %34 = vector.extract_strided_slice %33 {offsets = [0, 0], sizes = [8, 32], strides = [1, 1]} : vector<8x128xf32> to vector<8x32xf32>
    %35 = vector.extract_strided_slice %33 {offsets = [0, 32], sizes = [8, 32], strides = [1, 1]} : vector<8x128xf32> to vector<8x32xf32>
    %36 = vector.extract_strided_slice %33 {offsets = [0, 64], sizes = [8, 32], strides = [1, 1]} : vector<8x128xf32> to vector<8x32xf32>
    %37 = vector.extract_strided_slice %33 {offsets = [0, 96], sizes = [8, 32], strides = [1, 1]} : vector<8x128xf32> to vector<8x32xf32>
    %38 = arith.mulf %35, %17 : vector<8x32xf32>
    %39 = arith.mulf %34, %36 : vector<8x32xf32>
    %40 = arith.addf %38, %39 : vector<8x32xf32>
    %41 = math.tanh %40 : vector<8x32xf32>
    %42 = arith.mulf %37, %41 : vector<8x32xf32>
    %c0_15 = arith.constant 0 : index
    %43 = arith.index_cast %20 : i32 to index
    %c0_16 = arith.constant 0 : index
    %c0_17 = arith.constant 0 : index
    %44 = vector.load %arg4[%c0_15, %43, %c0_16, %c0_17] : memref<1x8x8x32xf32, #tpu.memory_space<vmem>>, vector<1x1x8x32xf32>
    %45 = vector.shape_cast %44 : vector<1x1x8x32xf32> to vector<8x32xf32>
    %46 = vector.shape_cast %42 : vector<8x32xf32> to vector<1x1x8x32xf32>
    tpu.vector_store %arg4[%c0_15, %43, %c0_16, %c0_17], %46 {strides = array<i32>} : memref<1x8x8x32xf32, #tpu.memory_space<vmem>>, vector<1x1x8x32xf32>,
    %c1_i32 = arith.constant 1 : i32
    %c0_i32_18 = arith.constant 0 : i32
    %47 = arith.cmpi eq, %arg0, %c0_i32_18 : i32
    %c7_i32_19 = arith.constant 7 : i32
    %48 = arith.subi %c7_i32_19, %c1_i32 : i32
    %49 = arith.select %47, %c1_i32, %48 : i32
    %c0_20 = arith.constant 0 : index
    %50 = arith.index_cast %49 : i32 to index
    %c0_21 = arith.constant 0 : index
    %c0_22 = arith.constant 0 : index
    %51 = vector.load %arg2[%c0_20, %50, %c0_21, %c0_22] : memref<1x8x8x128xf32, #tpu.memory_space<vmem>>, vector<1x1x8x128xf32>
    %52 = vector.shape_cast %51 : vector<1x1x8x128xf32> to vector<8x128xf32>
    %53 = arith.truncf %42 : vector<8x32xf32> to vector<8x32xbf16>
    %cst_23 = arith.constant dense<0.000000e+00> : vector<8x128xf32>
    %54 = tpu.matmul %53, %3, %cst_23 {dimension_numbers = #tpu.dot_dimension_numbers<[1], [0], [0], [1], [0, 0, 1, 1], [], []>} : vector<8x32xbf16>, vector<32x128xbf16>, vector<8x128xf32> -> vector<8x128xf32>
    %55 = arith.addf %52, %54 : vector<8x128xf32>
    %56 = vector.broadcast %12 : vector<1x128xf32> to vector<8x128xf32>
    %57 = arith.mulf %56, %55 : vector<8x128xf32>
    %58 = math.tanh %57 : vector<8x128xf32>
    %59 = vector.broadcast %12 : vector<1x128xf32> to vector<8x128xf32>
    %60 = arith.mulf %59, %58 : vector<8x128xf32>
    %61 = vector.broadcast %15 : vector<1x128xf32> to vector<8x128xf32>
    %62 = arith.addf %60, %61 : vector<8x128xf32>
    %63 = vector.extract_strided_slice %62 {offsets = [0, 0], sizes = [8, 32], strides = [1, 1]} : vector<8x128xf32> to vector<8x32xf32>
    %64 = vector.extract_strided_slice %62 {offsets = [0, 32], sizes = [8, 32], strides = [1, 1]} : vector<8x128xf32> to vector<8x32xf32>
    %65 = vector.extract_strided_slice %62 {offsets = [0, 64], sizes = [8, 32], strides = [1, 1]} : vector<8x128xf32> to vector<8x32xf32>
    %66 = vector.extract_strided_slice %62 {offsets = [0, 96], sizes = [8, 32], strides = [1, 1]} : vector<8x128xf32> to vector<8x32xf32>
    %67 = arith.mulf %64, %40 : vector<8x32xf32>
    %68 = arith.mulf %63, %65 : vector<8x32xf32>
    %69 = arith.addf %67, %68 : vector<8x32xf32>
    %70 = math.tanh %69 : vector<8x32xf32>
    %71 = arith.mulf %66, %70 : vector<8x32xf32>
    %c0_24 = arith.constant 0 : index
    %72 = arith.index_cast %49 : i32 to index
    %c0_25 = arith.constant 0 : index
    %c0_26 = arith.constant 0 : index
    %73 = vector.load %arg4[%c0_24, %72, %c0_25, %c0_26] : memref<1x8x8x32xf32, #tpu.memory_space<vmem>>, vector<1x1x8x32xf32>
    %74 = vector.shape_cast %73 : vector<1x1x8x32xf32> to vector<8x32xf32>
    %75 = vector.shape_cast %71 : vector<8x32xf32> to vector<1x1x8x32xf32>
    tpu.vector_store %arg4[%c0_24, %72, %c0_25, %c0_26], %75 {strides = array<i32>} : memref<1x8x8x32xf32, #tpu.memory_space<vmem>>, vector<1x1x8x32xf32>,
    %c2_i32 = arith.constant 2 : i32
    %c0_i32_27 = arith.constant 0 : i32
    %76 = arith.cmpi eq, %arg0, %c0_i32_27 : i32
    %c7_i32_28 = arith.constant 7 : i32
    %77 = arith.subi %c7_i32_28, %c2_i32 : i32
    %78 = arith.select %76, %c2_i32, %77 : i32
    %c0_29 = arith.constant 0 : index
    %79 = arith.index_cast %78 : i32 to index
    %c0_30 = arith.constant 0 : index
    %c0_31 = arith.constant 0 : index
    %80 = vector.load %arg2[%c0_29, %79, %c0_30, %c0_31] : memref<1x8x8x128xf32, #tpu.memory_space<vmem>>, vector<1x1x8x128xf32>
    %81 = vector.shape_cast %80 : vector<1x1x8x128xf32> to vector<8x128xf32>
    %82 = arith.truncf %71 : vector<8x32xf32> to vector<8x32xbf16>
    %cst_32 = arith.constant dense<0.000000e+00> : vector<8x128xf32>
    %83 = tpu.matmul %82, %3, %cst_32 {dimension_numbers = #tpu.dot_dimension_numbers<[1], [0], [0], [1], [0, 0, 1, 1], [], []>} : vector<8x32xbf16>, vector<32x128xbf16>, vector<8x128xf32> -> vector<8x128xf32>
    %84 = arith.addf %81, %83 : vector<8x128xf32>
    %85 = vector.broadcast %12 : vector<1x128xf32> to vector<8x128xf32>
    %86 = arith.mulf %85, %84 : vector<8x128xf32>
    %87 = math.tanh %86 : vector<8x128xf32>
    %88 = vector.broadcast %12 : vector<1x128xf32> to vector<8x128xf32>
    %89 = arith.mulf %88, %87 : vector<8x128xf32>
    %90 = vector.broadcast %15 : vector<1x128xf32> to vector<8x128xf32>
    %91 = arith.addf %89, %90 : vector<8x128xf32>
    %92 = vector.extract_strided_slice %91 {offsets = [0, 0], sizes = [8, 32], strides = [1, 1]} : vector<8x128xf32> to vector<8x32xf32>
    %93 = vector.extract_strided_slice %91 {offsets = [0, 32], sizes = [8, 32], strides = [1, 1]} : vector<8x128xf32> to vector<8x32xf32>
    %94 = vector.extract_strided_slice %91 {offsets = [0, 64], sizes = [8, 32], strides = [1, 1]} : vector<8x128xf32> to vector<8x32xf32>
    %95 = vector.extract_strided_slice %91 {offsets = [0, 96], sizes = [8, 32], strides = [1, 1]} : vector<8x128xf32> to vector<8x32xf32>
    %96 = arith.mulf %93, %69 : vector<8x32xf32>
    %97 = arith.mulf %92, %94 : vector<8x32xf32>
    %98 = arith.addf %96, %97 : vector<8x32xf32>
    %99 = math.tanh %98 : vector<8x32xf32>
    %100 = arith.mulf %95, %99 : vector<8x32xf32>
    %c0_33 = arith.constant 0 : index
    %101 = arith.index_cast %78 : i32 to index
    %c0_34 = arith.constant 0 : index
    %c0_35 = arith.constant 0 : index
    %102 = vector.load %arg4[%c0_33, %101, %c0_34, %c0_35] : memref<1x8x8x32xf32, #tpu.memory_space<vmem>>, vector<1x1x8x32xf32>
    %103 = vector.shape_cast %102 : vector<1x1x8x32xf32> to vector<8x32xf32>
    %104 = vector.shape_cast %100 : vector<8x32xf32> to vector<1x1x8x32xf32>
    tpu.vector_store %arg4[%c0_33, %101, %c0_34, %c0_35], %104 {strides = array<i32>} : memref<1x8x8x32xf32, #tpu.memory_space<vmem>>, vector<1x1x8x32xf32>,
    %c3_i32 = arith.constant 3 : i32
    %c0_i32_36 = arith.constant 0 : i32
    %105 = arith.cmpi eq, %arg0, %c0_i32_36 : i32
    %c7_i32_37 = arith.constant 7 : i32
    %106 = arith.subi %c7_i32_37, %c3_i32 : i32
    %107 = arith.select %105, %c3_i32, %106 : i32
    %c0_38 = arith.constant 0 : index
    %108 = arith.index_cast %107 : i32 to index
    %c0_39 = arith.constant 0 : index
    %c0_40 = arith.constant 0 : index
    %109 = vector.load %arg2[%c0_38, %108, %c0_39, %c0_40] : memref<1x8x8x128xf32, #tpu.memory_space<vmem>>, vector<1x1x8x128xf32>
    %110 = vector.shape_cast %109 : vector<1x1x8x128xf32> to vector<8x128xf32>
    %111 = arith.truncf %100 : vector<8x32xf32> to vector<8x32xbf16>
    %cst_41 = arith.constant dense<0.000000e+00> : vector<8x128xf32>
    %112 = tpu.matmul %111, %3, %cst_41 {dimension_numbers = #tpu.dot_dimension_numbers<[1], [0], [0], [1], [0, 0, 1, 1], [], []>} : vector<8x32xbf16>, vector<32x128xbf16>, vector<8x128xf32> -> vector<8x128xf32>
    %113 = arith.addf %110, %112 : vector<8x128xf32>
    %114 = vector.broadcast %12 : vector<1x128xf32> to vector<8x128xf32>
    %115 = arith.mulf %114, %113 : vector<8x128xf32>
    %116 = math.tanh %115 : vector<8x128xf32>
    %117 = vector.broadcast %12 : vector<1x128xf32> to vector<8x128xf32>
    %118 = arith.mulf %117, %116 : vector<8x128xf32>
    %119 = vector.broadcast %15 : vector<1x128xf32> to vector<8x128xf32>
    %120 = arith.addf %118, %119 : vector<8x128xf32>
    %121 = vector.extract_strided_slice %120 {offsets = [0, 0], sizes = [8, 32], strides = [1, 1]} : vector<8x128xf32> to vector<8x32xf32>
    %122 = vector.extract_strided_slice %120 {offsets = [0, 32], sizes = [8, 32], strides = [1, 1]} : vector<8x128xf32> to vector<8x32xf32>
    %123 = vector.extract_strided_slice %120 {offsets = [0, 64], sizes = [8, 32], strides = [1, 1]} : vector<8x128xf32> to vector<8x32xf32>
    %124 = vector.extract_strided_slice %120 {offsets = [0, 96], sizes = [8, 32], strides = [1, 1]} : vector<8x128xf32> to vector<8x32xf32>
    %125 = arith.mulf %122, %98 : vector<8x32xf32>
    %126 = arith.mulf %121, %123 : vector<8x32xf32>
    %127 = arith.addf %125, %126 : vector<8x32xf32>
    %128 = math.tanh %127 : vector<8x32xf32>
    %129 = arith.mulf %124, %128 : vector<8x32xf32>
    %c0_42 = arith.constant 0 : index
    %130 = arith.index_cast %107 : i32 to index
    %c0_43 = arith.constant 0 : index
    %c0_44 = arith.constant 0 : index
    %131 = vector.load %arg4[%c0_42, %130, %c0_43, %c0_44] : memref<1x8x8x32xf32, #tpu.memory_space<vmem>>, vector<1x1x8x32xf32>
    %132 = vector.shape_cast %131 : vector<1x1x8x32xf32> to vector<8x32xf32>
    %133 = vector.shape_cast %129 : vector<8x32xf32> to vector<1x1x8x32xf32>
    tpu.vector_store %arg4[%c0_42, %130, %c0_43, %c0_44], %133 {strides = array<i32>} : memref<1x8x8x32xf32, #tpu.memory_space<vmem>>, vector<1x1x8x32xf32>,
    %c4_i32 = arith.constant 4 : i32
    %c0_i32_45 = arith.constant 0 : i32
    %134 = arith.cmpi eq, %arg0, %c0_i32_45 : i32
    %c7_i32_46 = arith.constant 7 : i32
    %135 = arith.subi %c7_i32_46, %c4_i32 : i32
    %136 = arith.select %134, %c4_i32, %135 : i32
    %c0_47 = arith.constant 0 : index
    %137 = arith.index_cast %136 : i32 to index
    %c0_48 = arith.constant 0 : index
    %c0_49 = arith.constant 0 : index
    %138 = vector.load %arg2[%c0_47, %137, %c0_48, %c0_49] : memref<1x8x8x128xf32, #tpu.memory_space<vmem>>, vector<1x1x8x128xf32>
    %139 = vector.shape_cast %138 : vector<1x1x8x128xf32> to vector<8x128xf32>
    %140 = arith.truncf %129 : vector<8x32xf32> to vector<8x32xbf16>
    %cst_50 = arith.constant dense<0.000000e+00> : vector<8x128xf32>
    %141 = tpu.matmul %140, %3, %cst_50 {dimension_numbers = #tpu.dot_dimension_numbers<[1], [0], [0], [1], [0, 0, 1, 1], [], []>} : vector<8x32xbf16>, vector<32x128xbf16>, vector<8x128xf32> -> vector<8x128xf32>
    %142 = arith.addf %139, %141 : vector<8x128xf32>
    %143 = vector.broadcast %12 : vector<1x128xf32> to vector<8x128xf32>
    %144 = arith.mulf %143, %142 : vector<8x128xf32>
    %145 = math.tanh %144 : vector<8x128xf32>
    %146 = vector.broadcast %12 : vector<1x128xf32> to vector<8x128xf32>
    %147 = arith.mulf %146, %145 : vector<8x128xf32>
    %148 = vector.broadcast %15 : vector<1x128xf32> to vector<8x128xf32>
    %149 = arith.addf %147, %148 : vector<8x128xf32>
    %150 = vector.extract_strided_slice %149 {offsets = [0, 0], sizes = [8, 32], strides = [1, 1]} : vector<8x128xf32> to vector<8x32xf32>
    %151 = vector.extract_strided_slice %149 {offsets = [0, 32], sizes = [8, 32], strides = [1, 1]} : vector<8x128xf32> to vector<8x32xf32>
    %152 = vector.extract_strided_slice %149 {offsets = [0, 64], sizes = [8, 32], strides = [1, 1]} : vector<8x128xf32> to vector<8x32xf32>
    %153 = vector.extract_strided_slice %149 {offsets = [0, 96], sizes = [8, 32], strides = [1, 1]} : vector<8x128xf32> to vector<8x32xf32>
    %154 = arith.mulf %151, %127 : vector<8x32xf32>
    %155 = arith.mulf %150, %152 : vector<8x32xf32>
    %156 = arith.addf %154, %155 : vector<8x32xf32>
    %157 = math.tanh %156 : vector<8x32xf32>
    %158 = arith.mulf %153, %157 : vector<8x32xf32>
    %c0_51 = arith.constant 0 : index
    %159 = arith.index_cast %136 : i32 to index
    %c0_52 = arith.constant 0 : index
    %c0_53 = arith.constant 0 : index
    %160 = vector.load %arg4[%c0_51, %159, %c0_52, %c0_53] : memref<1x8x8x32xf32, #tpu.memory_space<vmem>>, vector<1x1x8x32xf32>
    %161 = vector.shape_cast %160 : vector<1x1x8x32xf32> to vector<8x32xf32>
    %162 = vector.shape_cast %158 : vector<8x32xf32> to vector<1x1x8x32xf32>
    tpu.vector_store %arg4[%c0_51, %159, %c0_52, %c0_53], %162 {strides = array<i32>} : memref<1x8x8x32xf32, #tpu.memory_space<vmem>>, vector<1x1x8x32xf32>,
    %c5_i32 = arith.constant 5 : i32
    %c0_i32_54 = arith.constant 0 : i32
    %163 = arith.cmpi eq, %arg0, %c0_i32_54 : i32
    %c7_i32_55 = arith.constant 7 : i32
    %164 = arith.subi %c7_i32_55, %c5_i32 : i32
    %165 = arith.select %163, %c5_i32, %164 : i32
    %c0_56 = arith.constant 0 : index
    %166 = arith.index_cast %165 : i32 to index
    %c0_57 = arith.constant 0 : index
    %c0_58 = arith.constant 0 : index
    %167 = vector.load %arg2[%c0_56, %166, %c0_57, %c0_58] : memref<1x8x8x128xf32, #tpu.memory_space<vmem>>, vector<1x1x8x128xf32>
    %168 = vector.shape_cast %167 : vector<1x1x8x128xf32> to vector<8x128xf32>
    %169 = arith.truncf %158 : vector<8x32xf32> to vector<8x32xbf16>
    %cst_59 = arith.constant dense<0.000000e+00> : vector<8x128xf32>
    %170 = tpu.matmul %169, %3, %cst_59 {dimension_numbers = #tpu.dot_dimension_numbers<[1], [0], [0], [1], [0, 0, 1, 1], [], []>} : vector<8x32xbf16>, vector<32x128xbf16>, vector<8x128xf32> -> vector<8x128xf32>
    %171 = arith.addf %168, %170 : vector<8x128xf32>
    %172 = vector.broadcast %12 : vector<1x128xf32> to vector<8x128xf32>
    %173 = arith.mulf %172, %171 : vector<8x128xf32>
    %174 = math.tanh %173 : vector<8x128xf32>
    %175 = vector.broadcast %12 : vector<1x128xf32> to vector<8x128xf32>
    %176 = arith.mulf %175, %174 : vector<8x128xf32>
    %177 = vector.broadcast %15 : vector<1x128xf32> to vector<8x128xf32>
    %178 = arith.addf %176, %177 : vector<8x128xf32>
    %179 = vector.extract_strided_slice %178 {offsets = [0, 0], sizes = [8, 32], strides = [1, 1]} : vector<8x128xf32> to vector<8x32xf32>
    %180 = vector.extract_strided_slice %178 {offsets = [0, 32], sizes = [8, 32], strides = [1, 1]} : vector<8x128xf32> to vector<8x32xf32>
    %181 = vector.extract_strided_slice %178 {offsets = [0, 64], sizes = [8, 32], strides = [1, 1]} : vector<8x128xf32> to vector<8x32xf32>
    %182 = vector.extract_strided_slice %178 {offsets = [0, 96], sizes = [8, 32], strides = [1, 1]} : vector<8x128xf32> to vector<8x32xf32>
    %183 = arith.mulf %180, %156 : vector<8x32xf32>
    %184 = arith.mulf %179, %181 : vector<8x32xf32>
    %185 = arith.addf %183, %184 : vector<8x32xf32>
    %186 = math.tanh %185 : vector<8x32xf32>
    %187 = arith.mulf %182, %186 : vector<8x32xf32>
    %c0_60 = arith.constant 0 : index
    %188 = arith.index_cast %165 : i32 to index
    %c0_61 = arith.constant 0 : index
    %c0_62 = arith.constant 0 : index
    %189 = vector.load %arg4[%c0_60, %188, %c0_61, %c0_62] : memref<1x8x8x32xf32, #tpu.memory_space<vmem>>, vector<1x1x8x32xf32>
    %190 = vector.shape_cast %189 : vector<1x1x8x32xf32> to vector<8x32xf32>
    %191 = vector.shape_cast %187 : vector<8x32xf32> to vector<1x1x8x32xf32>
    tpu.vector_store %arg4[%c0_60, %188, %c0_61, %c0_62], %191 {strides = array<i32>} : memref<1x8x8x32xf32, #tpu.memory_space<vmem>>, vector<1x1x8x32xf32>,
    %c6_i32 = arith.constant 6 : i32
    %c0_i32_63 = arith.constant 0 : i32
    %192 = arith.cmpi eq, %arg0, %c0_i32_63 : i32
    %c7_i32_64 = arith.constant 7 : i32
    %193 = arith.subi %c7_i32_64, %c6_i32 : i32
    %194 = arith.select %192, %c6_i32, %193 : i32
    %c0_65 = arith.constant 0 : index
    %195 = arith.index_cast %194 : i32 to index
    %c0_66 = arith.constant 0 : index
    %c0_67 = arith.constant 0 : index
    %196 = vector.load %arg2[%c0_65, %195, %c0_66, %c0_67] : memref<1x8x8x128xf32, #tpu.memory_space<vmem>>, vector<1x1x8x128xf32>
    %197 = vector.shape_cast %196 : vector<1x1x8x128xf32> to vector<8x128xf32>
    %198 = arith.truncf %187 : vector<8x32xf32> to vector<8x32xbf16>
    %cst_68 = arith.constant dense<0.000000e+00> : vector<8x128xf32>
    %199 = tpu.matmul %198, %3, %cst_68 {dimension_numbers = #tpu.dot_dimension_numbers<[1], [0], [0], [1], [0, 0, 1, 1], [], []>} : vector<8x32xbf16>, vector<32x128xbf16>, vector<8x128xf32> -> vector<8x128xf32>
    %200 = arith.addf %197, %199 : vector<8x128xf32>
    %201 = vector.broadcast %12 : vector<1x128xf32> to vector<8x128xf32>
    %202 = arith.mulf %201, %200 : vector<8x128xf32>
    %203 = math.tanh %202 : vector<8x128xf32>
    %204 = vector.broadcast %12 : vector<1x128xf32> to vector<8x128xf32>
    %205 = arith.mulf %204, %203 : vector<8x128xf32>
    %206 = vector.broadcast %15 : vector<1x128xf32> to vector<8x128xf32>
    %207 = arith.addf %205, %206 : vector<8x128xf32>
    %208 = vector.extract_strided_slice %207 {offsets = [0, 0], sizes = [8, 32], strides = [1, 1]} : vector<8x128xf32> to vector<8x32xf32>
    %209 = vector.extract_strided_slice %207 {offsets = [0, 32], sizes = [8, 32], strides = [1, 1]} : vector<8x128xf32> to vector<8x32xf32>
    %210 = vector.extract_strided_slice %207 {offsets = [0, 64], sizes = [8, 32], strides = [1, 1]} : vector<8x128xf32> to vector<8x32xf32>
    %211 = vector.extract_strided_slice %207 {offsets = [0, 96], sizes = [8, 32], strides = [1, 1]} : vector<8x128xf32> to vector<8x32xf32>
    %212 = arith.mulf %209, %185 : vector<8x32xf32>
    %213 = arith.mulf %208, %210 : vector<8x32xf32>
    %214 = arith.addf %212, %213 : vector<8x32xf32>
    %215 = math.tanh %214 : vector<8x32xf32>
    %216 = arith.mulf %211, %215 : vector<8x32xf32>
    %c0_69 = arith.constant 0 : index
    %217 = arith.index_cast %194 : i32 to index
    %c0_70 = arith.constant 0 : index
    %c0_71 = arith.constant 0 : index
    %218 = vector.load %arg4[%c0_69, %217, %c0_70, %c0_71] : memref<1x8x8x32xf32, #tpu.memory_space<vmem>>, vector<1x1x8x32xf32>
    %219 = vector.shape_cast %218 : vector<1x1x8x32xf32> to vector<8x32xf32>
    %220 = vector.shape_cast %216 : vector<8x32xf32> to vector<1x1x8x32xf32>
    tpu.vector_store %arg4[%c0_69, %217, %c0_70, %c0_71], %220 {strides = array<i32>} : memref<1x8x8x32xf32, #tpu.memory_space<vmem>>, vector<1x1x8x32xf32>,
    %c7_i32_72 = arith.constant 7 : i32
    %c0_i32_73 = arith.constant 0 : i32
    %221 = arith.cmpi eq, %arg0, %c0_i32_73 : i32
    %c7_i32_74 = arith.constant 7 : i32
    %222 = arith.subi %c7_i32_74, %c7_i32_72 : i32
    %223 = arith.select %221, %c7_i32_72, %222 : i32
    %c0_75 = arith.constant 0 : index
    %224 = arith.index_cast %223 : i32 to index
    %c0_76 = arith.constant 0 : index
    %c0_77 = arith.constant 0 : index
    %225 = vector.load %arg2[%c0_75, %224, %c0_76, %c0_77] : memref<1x8x8x128xf32, #tpu.memory_space<vmem>>, vector<1x1x8x128xf32>
    %226 = vector.shape_cast %225 : vector<1x1x8x128xf32> to vector<8x128xf32>
    %227 = arith.truncf %216 : vector<8x32xf32> to vector<8x32xbf16>
    %cst_78 = arith.constant dense<0.000000e+00> : vector<8x128xf32>
    %228 = tpu.matmul %227, %3, %cst_78 {dimension_numbers = #tpu.dot_dimension_numbers<[1], [0], [0], [1], [0, 0, 1, 1], [], []>} : vector<8x32xbf16>, vector<32x128xbf16>, vector<8x128xf32> -> vector<8x128xf32>
    %229 = arith.addf %226, %228 : vector<8x128xf32>
    %230 = vector.broadcast %12 : vector<1x128xf32> to vector<8x128xf32>
    %231 = arith.mulf %230, %229 : vector<8x128xf32>
    %232 = math.tanh %231 : vector<8x128xf32>
    %233 = vector.broadcast %12 : vector<1x128xf32> to vector<8x128xf32>
    %234 = arith.mulf %233, %232 : vector<8x128xf32>
    %235 = vector.broadcast %15 : vector<1x128xf32> to vector<8x128xf32>
    %236 = arith.addf %234, %235 : vector<8x128xf32>
    %237 = vector.extract_strided_slice %236 {offsets = [0, 0], sizes = [8, 32], strides = [1, 1]} : vector<8x128xf32> to vector<8x32xf32>
    %238 = vector.extract_strided_slice %236 {offsets = [0, 32], sizes = [8, 32], strides = [1, 1]} : vector<8x128xf32> to vector<8x32xf32>
    %239 = vector.extract_strided_slice %236 {offsets = [0, 64], sizes = [8, 32], strides = [1, 1]} : vector<8x128xf32> to vector<8x32xf32>
    %240 = vector.extract_strided_slice %236 {offsets = [0, 96], sizes = [8, 32], strides = [1, 1]} : vector<8x128xf32> to vector<8x32xf32>
    %241 = arith.mulf %238, %214 : vector<8x32xf32>
    %242 = arith.mulf %237, %239 : vector<8x32xf32>
    %243 = arith.addf %241, %242 : vector<8x32xf32>
    %244 = math.tanh %243 : vector<8x32xf32>
    %245 = arith.mulf %240, %244 : vector<8x32xf32>
    %c0_79 = arith.constant 0 : index
    %246 = arith.index_cast %223 : i32 to index
    %c0_80 = arith.constant 0 : index
    %c0_81 = arith.constant 0 : index
    %247 = vector.load %arg4[%c0_79, %246, %c0_80, %c0_81] : memref<1x8x8x32xf32, #tpu.memory_space<vmem>>, vector<1x1x8x32xf32>
    %248 = vector.shape_cast %247 : vector<1x1x8x32xf32> to vector<8x32xf32>
    %249 = vector.shape_cast %245 : vector<8x32xf32> to vector<1x1x8x32xf32>
    tpu.vector_store %arg4[%c0_79, %246, %c0_80, %c0_81], %249 {strides = array<i32>} : memref<1x8x8x32xf32, #tpu.memory_space<vmem>>, vector<1x1x8x32xf32>,
    %c8_i32 = arith.constant 8 : i32
    %c0_82 = arith.constant 0 : index
    %c0_83 = arith.constant 0 : index
    %250 = vector.load %arg7[%c0_82, %c0_83] : memref<8x32xf32, #tpu.memory_space<vmem>>, vector<8x32xf32>
    tpu.vector_store %arg7[%c0_82, %c0_83], %245 {strides = array<i32>} : memref<8x32xf32, #tpu.memory_space<vmem>>, vector<8x32xf32>,
    %c0_84 = arith.constant 0 : index
    %c0_85 = arith.constant 0 : index
    %251 = vector.load %arg8[%c0_84, %c0_85] : memref<8x32xf32, #tpu.memory_space<vmem>>, vector<8x32xf32>
    tpu.vector_store %arg8[%c0_84, %c0_85], %243 {strides = array<i32>} : memref<8x32xf32, #tpu.memory_space<vmem>>, vector<8x32xf32>,
    return
  }
  func.func @transform_0(%arg0: i32, %arg1: i32) -> (i32, i32, i32, i32) {
    %c1_i32 = arith.constant 1 : i32
    %0 = arith.subi %c1_i32, %arg0 : i32
    %1 = arith.muli %0, %arg1 : i32
    %c0_i32 = arith.constant 0 : i32
    %2 = arith.subi %c0_i32, %arg1 : i32
    %3 = arith.muli %arg0, %2 : i32
    %4 = arith.addi %1, %3 : i32
    %c0_i32_0 = arith.constant 0 : i32
    %c0_i32_1 = arith.constant 0 : i32
    %c0_i32_2 = arith.constant 0 : i32
    return %arg0, %4, %c0_i32_0, %c0_i32_1 : i32, i32, i32, i32
  }
  func.func @transform_2(%arg0: i32, %arg1: i32) -> (i32, i32, i32, i32) {
    %c1_i32 = arith.constant 1 : i32
    %0 = arith.subi %c1_i32, %arg0 : i32
    %1 = arith.muli %0, %arg1 : i32
    %c0_i32 = arith.constant 0 : i32
    %2 = arith.subi %c0_i32, %arg1 : i32
    %3 = arith.muli %arg0, %2 : i32
    %4 = arith.addi %1, %3 : i32
    %c0_i32_0 = arith.constant 0 : i32
    %c0_i32_1 = arith.constant 0 : i32
    %c0_i32_2 = arith.constant 0 : i32
    return %arg0, %4, %c0_i32_0, %c0_i32_1 : i32, i32, i32, i32
  }
}

</mosaic_0001>

<llo_original>
// kernel: muff_ner_forward.2
$region0: #{muff_ner_forward.2}
  #allocation0 [shape = 'u32[]', space=smem, size = 0x4, offset = 0x4, fixed_abs, tag = 'smem constant byte address 0x4 - core index']
  #allocation1 [shape = 'u32[144,128]{1,0:T(1,128)}', space=vmem, size = 0x12000, scoped, tag = 'internal scratch']
  #allocation2 [shape = 'bf16[32,128]{1,0:T(8,128)(2,1)}', space=vmem, size = 0x2000, scoped, tag = 'scratch operand']
  #allocation3 [shape = 's32[1]{0}', space=sflag, size = 0x4, scoped, tag = 'scratch operand']
  #allocation4 [shape = 'f32[8,32]{1,0:T(8,128)}', space=vmem, size = 0x1000, scoped, tag = 'scratch operand']
  #allocation5 [shape = 'f32[8,32]{1,0:T(8,128)}', space=vmem, size = 0x1000, scoped, tag = 'scratch operand']
  #allocation6 [shape = 's32[]', space=sflag, size = 0x4, offset = 0, fixed_abs, tag = 'sflag constant byte address 0x0 - dummy sync flag']
  %s0 = inlined_call_operand.vmem [shape: f32[2,8,8,128], index: 0, kind: input, shape index: {}]
  %s1 = inlined_call_operand.vmem [shape: bf16[2,32,128], index: 1, kind: input, shape index: {}]
  %s2 = inlined_call_operand.vmem [shape: f32[2,8,8,32], index: 2, kind: output, shape index: {}]
  %s3 = sld [smem:[#allocation0]]
  $region75: #{muff_ner_forward.2} parent=0
    _
  %s5 = ssub.s32 1, %s3
  %s6 = scalar_select 0, %s5, %s3
  loop: start=0, step=1, limit=4
  $region2: #{muff_ner_forward.2} parent=0 // loop_pre_header
    _
  $region3: #{muff_ner_forward.2} parent=0 // loop_header
    %s8 = sphi 0, %s12
    %p9 = scmp.ge.s32.totalorder %s8, 4
    %s15 = sphi 0, %s27
    %s16 = sphi 0, %s23
    %s17 = sphi 0, %s15
    %s18 = sphi 0, %s16
    %s19 = sphi 0, %s17
    %s20 = sphi 0, %s18
    %s42 = sphi 0, %s44
    %s45 = sphi 0, %s42
    %s46 = sphi 0, %s45
    %s62 = sphi 0, %s46
    %s80 = sphi 0, %s82
    %s83 = sphi 0, %s80
    %s84 = sphi 0, %s83
    %s100 = sphi 0, %s84
  $region4: #{muff_ner_forward.2} parent=0 // loop_header_branch
    %11 = sbr.rel (%p9) target = $region8
  $region5: #{muff_ner_forward.2} parent=0 // loop_body
    %s13 = ssub.s32 %s8, 1
    %s14 = ssub.s32 %s8, 2
    %s21 = sadd.s32 1, %s16
    %p22 = scmp.ge.s32.totalorder %s21, 1
    %s23 = scalar_select %p22, 0, %s21
    %s24 = sadd.s32 1, %s15
    %s25 = scalar_select %p22, %s24, %s15
    %p26 = scmp.ge.s32.totalorder %s25, 2
    %s27 = scalar_select %p26, 0, %s25
    %s28 = ssub.s32 1, %s15
    %s29 = smul.u32 %s28, %s16
    %s30 = ssub.s32 0, %s16
    %s31 = smul.u32 %s15, %s30
    %s32 = sadd.s32 %s29, %s31
    %s33 = ssub.s32 1, %s27
    %s34 = smul.u32 %s33, %s23
    %s35 = ssub.s32 0, %s23
    %s36 = smul.u32 %s27, %s35
    %s37 = sadd.s32 %s34, %s36
    %s38 = ssub.s32 %s15, %s27
    %s39 = ssub.s32 %s32, %s37
    %s40 = sor.u32 %s38, %s39
    %p41 = scmp.eq.s32.totalorder %s40, 0
    %s43 = sadd.s32 %s42, 1
    %s44 = scalar_select %p41, %s42, %s43
    %p47 = pneg %p41
    %p48 = scmp.eq.s32.totalorder %s8, 1
    %p49 = por %p47, %p48
    %p50 = scmp.ne.s32.totalorder %s42, %s45
    %p51 = scmp.eq.s32.totalorder %s8, 0
    %p52 = por %p50, %p51
    %p53 = scmp.ne.s32.totalorder %s42, %s45
    %p54 = scmp.eq.s32.totalorder %s13, 1
    %p55 = por %p53, %p54
    %p56 = scmp.ne.s32.totalorder %s45, %s46
    %p57 = scmp.eq.s32.totalorder %s13, 0
    %p58 = por %p56, %p57
    %p59 = scmp.ne.s32.totalorder %s45, %s46
    %p60 = scmp.eq.s32.totalorder %s14, 1
    %p61 = por %p59, %p60
    %p63 = scmp.ne.s32.totalorder %s46, %s62
    %p64 = scmp.eq.s32.totalorder %s14, 0
    %p65 = por %p63, %p64
    %s66 = ssub.s32 1, %s15
    %s67 = smul.u32 %s66, %s16
    %s68 = ssub.s32 0, %s16
    %s69 = smul.u32 %s15, %s68
    %s70 = sadd.s32 %s67, %s69
    %s71 = ssub.s32 1, %s27
    %s72 = smul.u32 %s71, %s23
    %s73 = ssub.s32 0, %s23
    %s74 = smul.u32 %s27, %s73
    %s75 = sadd.s32 %s72, %s74
    %s76 = ssub.s32 %s15, %s27
    %s77 = ssub.s32 %s70, %s75
    %s78 = sor.u32 %s76, %s77
    %p79 = scmp.eq.s32.totalorder %s78, 0
    %s81 = sadd.s32 %s80, 1
    %s82 = scalar_select %p79, %s80, %s81
    %p85 = pneg %p79
    %p86 = scmp.eq.s32.totalorder %s8, 1
    %p87 = por %p85, %p86
    %p88 = scmp.ne.s32.totalorder %s80, %s83
    %p89 = scmp.eq.s32.totalorder %s8, 0
    %p90 = por %p88, %p89
    %p91 = scmp.ne.s32.totalorder %s80, %s83
    %p92 = scmp.eq.s32.totalorder %s13, 1
    %p93 = por %p91, %p92
    %p94 = scmp.ne.s32.totalorder %s83, %s84
    %p95 = scmp.eq.s32.totalorder %s13, 0
    %p96 = por %p94, %p95
    %p97 = scmp.ne.s32.totalorder %s83, %s84
    %p98 = scmp.eq.s32.totalorder %s14, 1
    %p99 = por %p97, %p98
    %p101 = scmp.ne.s32.totalorder %s84, %s100
    %p102 = scmp.eq.s32.totalorder %s14, 0
    %p103 = por %p101, %p102
    %p104 = scmp.le.s32.totalorder 1, %s8
    %p105 = scmp.lt.s32.totalorder %s8, 3
    %p106 = pnand %p104, %p105
    %p107 = pneg %p106
    // Predicated region
    $region9: #{muff_ner_forward.2} parent=5 // pred_check
      _
    $region10: #{muff_ner_forward.2} parent=5 // pred_check_branch
      %109 = sbr.rel (%p106) target = $region12
    $region11: #{muff_ner_forward.2} parent=5 // pred_region
      %s110 = ssub.s32 %s8, 1
    $region12: #{muff_ner_forward.2} parent=5 // pred_fallthru
      _
    %p111 = scmp.lt.s32.totalorder %s8, 2
    // Predicated region
    $region13: #{muff_ner_forward.2} parent=5 // pred_check
      %p112 = pneg %p111
    $region14: #{muff_ner_forward.2} parent=5 // pred_check_branch
      %114 = sbr.rel (%p112) target = $region16
    $region15: #{muff_ner_forward.2} parent=5 // pred_region
      // Predicated region
      $region17: #{muff_ner_forward.2} parent=15 // pred_check
        %p115 = pneg %p52
      $region18: #{muff_ner_forward.2} parent=15 // pred_check_branch
        %117 = sbr.rel (%p115) target = $region20
      $region19: #{muff_ner_forward.2} parent=15 // pred_region
        %s118 = ssub.s32 1, %s15
        %s119 = smul.u32 %s118, %s16
        %s120 = ssub.s32 0, %s16
        %s121 = smul.u32 %s15, %s120
        %s122 = sadd.s32 %s119, %s121
        %s123 = smul.u32 8, %s122
        %p124 = scmp.lt.s32.totalorder %s15, 1
        %s125 = scalar_select %p124, %s15, 1
        %p126 = scmp.lt.s32.totalorder %s123, 7
        %s127 = scalar_select %p126, %s123, 7
        %s128 = smul.addr %s125, 8
        %s129 = sadd.s32 %s127, %s128
        %s130 = smul.addr %s129, 8
        %s131 = scalar_lea.vmem %s0, %s130
        %s132 = ssub.s32 1, %s15
        %s133 = smul.u32 %s132, %s16
        %s134 = ssub.s32 0, %s16
        %s135 = smul.u32 %s15, %s134
        %s136 = sadd.s32 %s133, %s135
        %s137 = smul.u32 8, %s136
      $region20: #{muff_ner_forward.2} parent=15 // pred_fallthru
        _
    $region16: #{muff_ner_forward.2} parent=5 // pred_fallthru
      _
    %p138 = scmp.le.s32.totalorder 1, %s8
    %p139 = scmp.lt.s32.totalorder %s8, 3
    %p140 = pnand %p138, %p139
    %p141 = pneg %p140
    // Predicated region
    $region21: #{muff_ner_forward.2} parent=5 // pred_check
      _
    $region22: #{muff_ner_forward.2} parent=5 // pred_check_branch
      %143 = sbr.rel (%p140) target = $region24
    $region23: #{muff_ner_forward.2} parent=5 // pred_region
      %s144 = ssub.s32 %s8, 1
      %s145 = ssub.s32 1, %s17
      %s146 = smul.u32 %s145, %s18
      %s147 = ssub.s32 0, %s18
      %s148 = smul.u32 %s17, %s147
      %s149 = sadd.s32 %s146, %s148
      %s150 = smul.u32 8, %s149
      %p151 = scmp.lt.s32.totalorder %s17, 1
      %s152 = scalar_select %p151, %s17, 1
      %p153 = scmp.lt.s32.totalorder %s150, 7
      %s154 = scalar_select %p153, %s150, 7
      %s155 = smul.addr %s152, 8
      %s156 = sadd.s32 %s154, %s155
      %s157 = smul.addr %s156, 8
      %s158 = scalar_lea.vmem %s0, %s157
      %p159 = pneg %p58
      %p160 = pneg %p55
      %p161 = pneg %p96
      %p162 = pneg %p93
      %s163 = ssub.s32 1, %s17
      %s164 = smul.u32 %s163, %s18
      %s165 = ssub.s32 0, %s18
      %s166 = smul.u32 %s17, %s165
      %s167 = sadd.s32 %s164, %s166
      %s168 = smul.u32 8, %s167
      %p169 = scmp.lt.s32.totalorder %s17, 1
      %s170 = scalar_select %p169, %s17, 1
      %p171 = scmp.lt.s32.totalorder %s168, 7
      %s172 = scalar_select %p171, %s168, 7
      %s173 = smul.addr %s170, 8
      %s174 = sadd.s32 %s172, %s173
      %s175 = smul.addr %s174, 8
      %s176 = scalar_lea.vmem %s2, %s175
      %s177 = ssub.s32 1, %s17
      %s178 = smul.u32 %s177, %s18
      %s179 = ssub.s32 0, %s18
      %s180 = smul.u32 %s17, %s179
      %s181 = sadd.s32 %s178, %s180
      %s182 = smul.u32 8, %s181
      %p183 = scmp.lt.s32.totalorder %s17, 1
      %s184 = scalar_select %p183, %s17, 1
      %p185 = scmp.lt.s32.totalorder %s182, 7
      %s186 = scalar_select %p185, %s182, 7
      %s187 = smul.addr %s184, 8
      %s188 = sadd.s32 %s186, %s187
      %s189 = smul.addr %s188, 8
      %s190 = scalar_lea.vmem %s0, %s189
      %s191 = ssub.s32 1, %s17
      %s192 = smul.u32 %s191, %s18
      %s193 = ssub.s32 0, %s18
      %s194 = smul.u32 %s17, %s193
      %s195 = sadd.s32 %s192, %s194
      %s196 = smul.u32 8, %s195
      %s197 = ssub.s32 1, %s17
      %s198 = smul.u32 %s197, %s18
      %s199 = ssub.s32 0, %s18
      %s200 = smul.u32 %s17, %s199
      %s201 = sadd.s32 %s198, %s200
      %s202 = smul.u32 8, %s201
      %p203 = scmp.lt.s32.totalorder %s17, 1
      %s204 = scalar_select %p203, %s17, 1
      %p205 = scmp.lt.s32.totalorder %s202, 7
      %s206 = scalar_select %p205, %s202, 7
      %s207 = smul.addr %s204, 8
      %s208 = sadd.s32 %s206, %s207
      %s209 = smul.addr %s208, 8
      %s210 = scalar_lea.vmem %s2, %s209
      %s211 = ssub.s32 1, %s17
      %s212 = smul.u32 %s211, %s18
      %s213 = ssub.s32 0, %s18
      %s214 = smul.u32 %s17, %s213
      %s215 = sadd.s32 %s212, %s214
      %s216 = smul.u32 8, %s215
      %p218 = scmp.eq.s32.totalorder %s18, 0
      // Predicated region
      $region25: #{muff_ner_forward.2} parent=23 // pred_check
        %p219 = pneg %p218
      $region26: #{muff_ner_forward.2} parent=23 // pred_check_branch
        %221 = sbr.rel (%p219) target = $region28
      $region27: #{muff_ner_forward.2} parent=23 // pred_region
        %s222 = smul.u32 %s17, 4
        %s223 = smul.addr %s222, 4
        %s224 = scalar_lea.vmem %s1, %s223
        %p226 = scmp.lt.u32.totalorder 16, 8
        %p227 = pneg %p226
        // Predicated region
        $region29: #{muff_ner_forward.2} parent=27 // pred_check
          _
        $region30: #{muff_ner_forward.2} parent=27 // pred_check_branch
          %229 = sbr.rel (%p226) target = $region32
        $region31: #{muff_ner_forward.2} parent=27 // pred_region
          %s245 = sand.u32 16, 7
          %p246 = scmp.eq.s32.totalorder %s245, 0
          // Predicated region
          $region44: #{muff_ner_forward.2} parent=31 // pred_check
            %p247 = pneg %p246
          $region45: #{muff_ner_forward.2} parent=31 // pred_check_branch
            %249 = sbr.rel (%p247) target = $region47
          $region46: #{muff_ner_forward.2} parent=31 // pred_region
            loop: start=0, step=1, limit=1
            $region48: #{muff_ner_forward.2} parent=46 // loop_pre_header
              _
            $region49: #{muff_ner_forward.2} parent=46 // loop_header
              %s251 = sphi 0, %s255
              %p252 = scmp.ge.s32.totalorder %s251, 1
              %s256 = sphi %s224, %s224
              %s257 = sphi [#allocation2], [#allocation2]
            $region50: #{muff_ner_forward.2} parent=46 // loop_header_branch
              %254 = sbr.rel (%p252) target = $region54
            $region51: #{muff_ner_forward.2} parent=46 // loop_body
              %v258 = vld [vmem:[%s256] sm:$0xff]
              %259 = vst [vmem:[%s257] sm:$0xff] %v258
              %v260 = vld [vmem:[%s256 + $0x8] sm:$0xff]
              %261 = vst [vmem:[%s257 + $0x8] sm:$0xff] %v260
            $region52: #{muff_ner_forward.2} parent=46 // loop_footer
              %s255 = sadd.s32 1, %s251
            $region53: #{muff_ner_forward.2} parent=46 // loop_footer_branch
              %250 = sbr.rel target = $region49
            $region54: #{muff_ner_forward.2} parent=46 // loop_exit
              _
          $region47: #{muff_ner_forward.2} parent=31 // pred_fallthru
            _
          %p262 = pneg %p246
          // Predicated region
          $region55: #{muff_ner_forward.2} parent=31 // pred_check
            _
          $region56: #{muff_ner_forward.2} parent=31 // pred_check_branch
            %264 = sbr.rel (%p246) target = $region58
          $region57: #{muff_ner_forward.2} parent=31 // pred_region
            %s265 = sand.u32 16, 7
          $region58: #{muff_ner_forward.2} parent=31 // pred_fallthru
            _
        $region32: #{muff_ner_forward.2} parent=27 // pred_fallthru
          _
        // Predicated region
        $region33: #{muff_ner_forward.2} parent=27 // pred_check
          %p230 = pneg %p226
        $region34: #{muff_ner_forward.2} parent=27 // pred_check_branch
          %232 = sbr.rel (%p230) target = $region36
        $region35: #{muff_ner_forward.2} parent=27 // pred_region
          %s233 = sshll.u32 1, 16
          %s234 = ssub.s32 %s233, 1
          loop: start=0, step=1, limit=1
          $region37: #{muff_ner_forward.2} parent=35 // loop_pre_header
            _
          $region38: #{muff_ner_forward.2} parent=35 // loop_header
            %s236 = sphi 0, %s240
            %p237 = scmp.ge.s32.totalorder %s236, 1
            %s241 = sphi %s224, %s224
            %s242 = sphi [#allocation2], [#allocation2]
          $region39: #{muff_ner_forward.2} parent=35 // loop_header_branch
            %239 = sbr.rel (%p237) target = $region43
          $region40: #{muff_ner_forward.2} parent=35 // loop_body
            %v243 = vld [vmem:[%s241] sm:%s234]
            %244 = vst [vmem:[%s242] sm:%s234] %v243
          $region41: #{muff_ner_forward.2} parent=35 // loop_footer
            %s240 = sadd.s32 1, %s236
          $region42: #{muff_ner_forward.2} parent=35 // loop_footer_branch
            %235 = sbr.rel target = $region38
          $region43: #{muff_ner_forward.2} parent=35 // loop_exit
            _
        $region36: #{muff_ner_forward.2} parent=27 // pred_fallthru
          _
        // Predicated region
        $region59: #{muff_ner_forward.2} parent=27 // pred_check
          _
        $region60: #{muff_ner_forward.2} parent=27 // pred_check_branch
          %268 = sbr.rel (0) target = $region62
        $region61: #{muff_ner_forward.2} parent=27 // pred_region
          %269 = vsyncadd [#allocation3], 256
        $region62: #{muff_ner_forward.2} parent=27 // pred_fallthru
          _
        %s270 = smul.u32 4, 4
        %s271 = smul.u32 %s270, 1
        %s272 = sshll.u32 %s271, 4
        %273 = dma.done [#allocation3], %s272
        %vm274 = vcmask 261120
        %275 = vst.msk [vmem:[#allocation4] sm:$0xff] %vm274, 0.0
        %276 = vst.msk [vmem:[#allocation5] sm:$0xff] %vm274, 0.0
      $region28: #{muff_ner_forward.2} parent=23 // pred_fallthru
        _
      %v277 = vld [vmem:[#allocation2] sm:$0xf]
      %v278 = vld [vmem:[#allocation2 + $0x4] sm:$0xf]
      %v279 = vld [vmem:[#allocation2 + $0x8] sm:$0xf]
      %v280 = vld [vmem:[#allocation2 + $0xc] sm:$0xf]
      %v281 = vlaneseq
      %v282 = vand.u32 %v281, 127
      %vm283 = vcmp.ge.s32.totalorder %v282, 64
      %vm284 = vcmp.lt.s32.totalorder %v282, 96
      %vm285 = vmand %vm283, %vm284
      %v286 = vsel %vm285, 1.0, 0.5
      %v287 = vsel %vm285, 0.0, 0.5
      %v288 = vld [vmem:[#allocation4] sm:$0xff]
      %v289 = vld [vmem:[#allocation5] sm:$0xff]
      %p290 = scmp.eq.s32.totalorder %s17, 0
      %s291 = scalar_select %p290, 0, 7
      %s292 = smul.u32 %s291, 8
      %s293 = scalar_lea.vmem %s190, %s292
      %v294 = vld [vmem:[%s293] sm:$0xff]
      %v295 = vpack.c.bf16 %v288, %v288
      %v300 = vunpack.c.l.b16 %v277
      %v301 = vunpack.c.l.b16 %v278
      %v302 = vunpack.c.l.b16 %v279
      %v303 = vunpack.c.l.b16 %v280
      %v304 = vpack.c.b16 %v301, %v300
      %v305 = vpack.c.b16 %v303, %v302
      %vm308 = vcmask 261120
      %v310 = vsel %vm308, %v295, 0
      %312 = vmatprep.subr.bf16.mxu0 0
      %313 = vmatpush1.bf16.msra.mxu0 0
      %314 = vmatprep.subr.bf16.mxu0 0
      %315 = vmatpush1.bf16.msra.mxu0 0
      %316 = vmatprep.subr.bf16.mxu0 0
      %317 = vmatpush1.bf16.msra.mxu0 0
      %318 = vmatprep.subr.bf16.mxu0 0
      %319 = vmatpush1.bf16.msra.mxu0 0
      %320 = vmatprep.subr.bf16.mxu0 0
      %321 = vmatpush1.bf16.msra.mxu0 0
      %322 = vmatprep.subr.bf16.mxu0 0
      %323 = vmatpush1.bf16.msra.mxu0 0
      %324 = vmatprep.subr.bf16.mxu0 0
      %325 = vmatpush1.bf16.msra.mxu0 %v305
      %326 = vmatprep.subr.bf16.mxu0 0
      %327 = vmatpush1.bf16.msra.mxu0 %v304
      %328 = vmatprep.subr.bf16.mxu0 0
      %329 = vmatpush2.bf16.msra.mxu0 0
      %330 = vmatprep.subr.bf16.mxu0 0
      %331 = vmatpush2.bf16.msra.mxu0 0
      %332 = vmatprep.subr.bf16.mxu0 0
      %333 = vmatpush2.bf16.msra.mxu0 0
      %334 = vmatprep.subr.bf16.mxu0 0
      %335 = vmatpush2.bf16.msra.mxu0 0
      %336 = vmatprep.subr.bf16.mxu0 0
      %337 = vmatpush2.bf16.msra.mxu0 0
      %338 = vmatprep.subr.bf16.mxu0 0
      %339 = vmatpush2.bf16.msra.mxu0 0
      %340 = vmatprep.subr.bf16.mxu0 0
      %341 = vmatpush2.bf16.msra.mxu0 0
      %342 = vmatprep.subr.bf16.mxu0 0
      %343 = vmatpush2.bf16.msra.mxu0 0
      %344 = vmatprep.mubr.bf16.mxu0 0
      %345 = vmatmul.mubr.bf16.gmra.mxu0 %v310
      %v346 = vpop.f32.mrf.mxu0
      %v347 = vadd.f32 0.0, %v346
      %v348 = vpop.f32.mrf.mxu0
      %v349 = vpop.f32.mrf.mxu0
      %v350 = vpop.f32.mrf.mxu0
      %351 = vdwg.mxu0
      %v352 = vadd.f32 %v294, %v347
      %v353 = vmul.f32 %v286, %v352
      %v354 = vtanh.pop %v353
      %v355 = vmul.f32 %v286, %v354
      %v356 = vadd.f32 %v355, %v287
      %358 = vrot.lane.b32.xlu0 %v289, 32
      %v359 = vpop.permute.xlu0 %358
      %v361 = vmul.f32 %v356, %v359
      %363 = vrot.lane.b32.xlu0 %v356, 64
      %v364 = vpop.permute.xlu0 %363
      %v366 = vmul.f32 %v356, %v364
      %368 = vrot.lane.b32.xlu0 %v366, 32
      %v369 = vpop.permute.xlu0 %368
      %v371 = vadd.f32 %v361, %v369
      %v372 = vtanh.pop %v371
      %374 = vrot.lane.b32.xlu0 %v372, 64
      %v375 = vpop.permute.xlu0 %374
      %v377 = vmul.f32 %v356, %v375
      %379 = vrot.lane.b32.xlu0 %v377, 32
      %v380 = vpop.permute.xlu0 %379
      %s382 = scalar_lea.vmem %s210, %s292
      %383 = vst.msk [vmem:[%s382] sm:$0xff] %vm308, %v380
      %s384 = scalar_select %p290, 1, 6
      %s385 = smul.u32 %s384, 8
      %s386 = scalar_lea.vmem %s190, %s385
      %v387 = vld [vmem:[%s386] sm:$0xff]
      %v388 = vpack.c.bf16 %v377, %v377
      %390 = vrot.lane.b32.xlu0 %v388, 32
      %v391 = vpop.permute.xlu0 %390
      %v393 = vsel %vm308, %v391, 0
      %395 = vmatprep.subr.bf16.mxu0 0
      %396 = vmatpush1.bf16.msra.mxu0 0
      %397 = vmatprep.subr.bf16.mxu0 0
      %398 = vmatpush1.bf16.msra.mxu0 0
      %399 = vmatprep.subr.bf16.mxu0 0
      %400 = vmatpush1.bf16.msra.mxu0 0
      %401 = vmatprep.subr.bf16.mxu0 0
      %402 = vmatpush1.bf16.msra.mxu0 0
      %403 = vmatprep.subr.bf16.mxu0 0
      %404 = vmatpush1.bf16.msra.mxu0 0
      %405 = vmatprep.subr.bf16.mxu0 0
      %406 = vmatpush1.bf16.msra.mxu0 0
      %407 = vmatprep.subr.bf16.mxu0 0
      %408 = vmatpush1.bf16.msra.mxu0 %v305
      %409 = vmatprep.subr.bf16.mxu0 0
      %410 = vmatpush1.bf16.msra.mxu0 %v304
      %411 = vmatprep.subr.bf16.mxu0 0
      %412 = vmatpush2.bf16.msra.mxu0 0
      %413 = vmatprep.subr.bf16.mxu0 0
      %414 = vmatpush2.bf16.msra.mxu0 0
      %415 = vmatprep.subr.bf16.mxu0 0
      %416 = vmatpush2.bf16.msra.mxu0 0
      %417 = vmatprep.subr.bf16.mxu0 0
      %418 = vmatpush2.bf16.msra.mxu0 0
      %419 = vmatprep.subr.bf16.mxu0 0
      %420 = vmatpush2.bf16.msra.mxu0 0
      %421 = vmatprep.subr.bf16.mxu0 0
      %422 = vmatpush2.bf16.msra.mxu0 0
      %423 = vmatprep.subr.bf16.mxu0 0
      %424 = vmatpush2.bf16.msra.mxu0 0
      %425 = vmatprep.subr.bf16.mxu0 0
      %426 = vmatpush2.bf16.msra.mxu0 0
      %427 = vmatprep.mubr.bf16.mxu0 0
      %428 = vmatmul.mubr.bf16.gmra.mxu0 %v393
      %v429 = vpop.f32.mrf.mxu0
      %v430 = vadd.f32 0.0, %v429
      %v431 = vpop.f32.mrf.mxu0
      %v432 = vpop.f32.mrf.mxu0
      %v433 = vpop.f32.mrf.mxu0
      %434 = vdwg.mxu0
      %v435 = vadd.f32 %v387, %v430
      %v436 = vmul.f32 %v286, %v435
      %v437 = vtanh.pop %v436
      %v438 = vmul.f32 %v286, %v437
      %v439 = vadd.f32 %v438, %v287
      %v440 = vmul.f32 %v439, %v371
      %442 = vrot.lane.b32.xlu0 %v439, 64
      %v443 = vpop.permute.xlu0 %442
      %v445 = vmul.f32 %v439, %v443
      %447 = vrot.lane.b32.xlu0 %v445, 32
      %v448 = vpop.permute.xlu0 %447
      %v450 = vadd.f32 %v440, %v448
      %v451 = vtanh.pop %v450
      %453 = vrot.lane.b32.xlu0 %v451, 64
      %v454 = vpop.permute.xlu0 %453
      %v456 = vmul.f32 %v439, %v454
      %458 = vrot.lane.b32.xlu0 %v456, 32
      %v459 = vpop.permute.xlu0 %458
      %s461 = scalar_lea.vmem %s210, %s385
      %462 = vst.msk [vmem:[%s461] sm:$0xff] %vm308, %v459
      %s463 = scalar_select %p290, 2, 5
      %s464 = smul.u32 %s463, 8
      %s465 = scalar_lea.vmem %s190, %s464
      %v466 = vld [vmem:[%s465] sm:$0xff]
      %v467 = vpack.c.bf16 %v456, %v456
      %469 = vrot.lane.b32.xlu0 %v467, 32
      %v470 = vpop.permute.xlu0 %469
      %v472 = vsel %vm308, %v470, 0
      %474 = vmatprep.subr.bf16.mxu0 0
      %475 = vmatpush1.bf16.msra.mxu0 0
      %476 = vmatprep.subr.bf16.mxu0 0
      %477 = vmatpush1.bf16.msra.mxu0 0
      %478 = vmatprep.subr.bf16.mxu0 0
      %479 = vmatpush1.bf16.msra.mxu0 0
      %480 = vmatprep.subr.bf16.mxu0 0
      %481 = vmatpush1.bf16.msra.mxu0 0
      %482 = vmatprep.subr.bf16.mxu0 0
      %483 = vmatpush1.bf16.msra.mxu0 0
      %484 = vmatprep.subr.bf16.mxu0 0
      %485 = vmatpush1.bf16.msra.mxu0 0
      %486 = vmatprep.subr.bf16.mxu0 0
      %487 = vmatpush1.bf16.msra.mxu0 %v305
      %488 = vmatprep.subr.bf16.mxu0 0
      %489 = vmatpush1.bf16.msra.mxu0 %v304
      %490 = vmatprep.subr.bf16.mxu0 0
      %491 = vmatpush2.bf16.msra.mxu0 0
      %492 = vmatprep.subr.bf16.mxu0 0
      %493 = vmatpush2.bf16.msra.mxu0 0
      %494 = vmatprep.subr.bf16.mxu0 0
      %495 = vmatpush2.bf16.msra.mxu0 0
      %496 = vmatprep.subr.bf16.mxu0 0
      %497 = vmatpush2.bf16.msra.mxu0 0
      %498 = vmatprep.subr.bf16.mxu0 0
      %499 = vmatpush2.bf16.msra.mxu0 0
      %500 = vmatprep.subr.bf16.mxu0 0
      %501 = vmatpush2.bf16.msra.mxu0 0
      %502 = vmatprep.subr.bf16.mxu0 0
      %503 = vmatpush2.bf16.msra.mxu0 0
      %504 = vmatprep.subr.bf16.mxu0 0
      %505 = vmatpush2.bf16.msra.mxu0 0
      %506 = vmatprep.mubr.bf16.mxu0 0
      %507 = vmatmul.mubr.bf16.gmra.mxu0 %v472
      %v508 = vpop.f32.mrf.mxu0
      %v509 = vadd.f32 0.0, %v508
      %v510 = vpop.f32.mrf.mxu0
      %v511 = vpop.f32.mrf.mxu0
      %v512 = vpop.f32.mrf.mxu0
      %513 = vdwg.mxu0
      %v514 = vadd.f32 %v466, %v509
      %v515 = vmul.f32 %v286, %v514
      %v516 = vtanh.pop %v515
      %v517 = vmul.f32 %v286, %v516
      %v518 = vadd.f32 %v517, %v287
      %v519 = vmul.f32 %v518, %v450
      %521 = vrot.lane.b32.xlu0 %v518, 64
      %v522 = vpop.permute.xlu0 %521
      %v524 = vmul.f32 %v518, %v522
      %526 = vrot.lane.b32.xlu0 %v524, 32
      %v527 = vpop.permute.xlu0 %526
      %v529 = vadd.f32 %v519, %v527
      %v530 = vtanh.pop %v529
      %532 = vrot.lane.b32.xlu0 %v530, 64
      %v533 = vpop.permute.xlu0 %532
      %v535 = vmul.f32 %v518, %v533
      %537 = vrot.lane.b32.xlu0 %v535, 32
      %v538 = vpop.permute.xlu0 %537
      %s540 = scalar_lea.vmem %s210, %s464
      %541 = vst.msk [vmem:[%s540] sm:$0xff] %vm308, %v538
      %s542 = scalar_select %p290, 3, 4
      %s543 = smul.u32 %s542, 8
      %s544 = scalar_lea.vmem %s190, %s543
      %v545 = vld [vmem:[%s544] sm:$0xff]
      %v546 = vpack.c.bf16 %v535, %v535
      %548 = vrot.lane.b32.xlu0 %v546, 32
      %v549 = vpop.permute.xlu0 %548
      %v551 = vsel %vm308, %v549, 0
      %553 = vmatprep.subr.bf16.mxu0 0
      %554 = vmatpush1.bf16.msra.mxu0 0
      %555 = vmatprep.subr.bf16.mxu0 0
      %556 = vmatpush1.bf16.msra.mxu0 0
      %557 = vmatprep.subr.bf16.mxu0 0
      %558 = vmatpush1.bf16.msra.mxu0 0
      %559 = vmatprep.subr.bf16.mxu0 0
      %560 = vmatpush1.bf16.msra.mxu0 0
      %561 = vmatprep.subr.bf16.mxu0 0
      %562 = vmatpush1.bf16.msra.mxu0 0
      %563 = vmatprep.subr.bf16.mxu0 0
      %564 = vmatpush1.bf16.msra.mxu0 0
      %565 = vmatprep.subr.bf16.mxu0 0
      %566 = vmatpush1.bf16.msra.mxu0 %v305
      %567 = vmatprep.subr.bf16.mxu0 0
      %568 = vmatpush1.bf16.msra.mxu0 %v304
      %569 = vmatprep.subr.bf16.mxu0 0
      %570 = vmatpush2.bf16.msra.mxu0 0
      %571 = vmatprep.subr.bf16.mxu0 0
      %572 = vmatpush2.bf16.msra.mxu0 0
      %573 = vmatprep.subr.bf16.mxu0 0
      %574 = vmatpush2.bf16.msra.mxu0 0
      %575 = vmatprep.subr.bf16.mxu0 0
      %576 = vmatpush2.bf16.msra.mxu0 0
      %577 = vmatprep.subr.bf16.mxu0 0
      %578 = vmatpush2.bf16.msra.mxu0 0
      %579 = vmatprep.subr.bf16.mxu0 0
      %580 = vmatpush2.bf16.msra.mxu0 0
      %581 = vmatprep.subr.bf16.mxu0 0
      %582 = vmatpush2.bf16.msra.mxu0 0
      %583 = vmatprep.subr.bf16.mxu0 0
      %584 = vmatpush2.bf16.msra.mxu0 0
      %585 = vmatprep.mubr.bf16.mxu0 0
      %586 = vmatmul.mubr.bf16.gmra.mxu0 %v551
      %v587 = vpop.f32.mrf.mxu0
      %v588 = vadd.f32 0.0, %v587
      %v589 = vpop.f32.mrf.mxu0
      %v590 = vpop.f32.mrf.mxu0
      %v591 = vpop.f32.mrf.mxu0
      %592 = vdwg.mxu0
      %v593 = vadd.f32 %v545, %v588
      %v594 = vmul.f32 %v286, %v593
      %v595 = vtanh.pop %v594
      %v596 = vmul.f32 %v286, %v595
      %v597 = vadd.f32 %v596, %v287
      %v598 = vmul.f32 %v597, %v529
      %600 = vrot.lane.b32.xlu0 %v597, 64
      %v601 = vpop.permute.xlu0 %600
      %v603 = vmul.f32 %v597, %v601
      %605 = vrot.lane.b32.xlu0 %v603, 32
      %v606 = vpop.permute.xlu0 %605
      %v608 = vadd.f32 %v598, %v606
      %v609 = vtanh.pop %v608
      %611 = vrot.lane.b32.xlu0 %v609, 64
      %v612 = vpop.permute.xlu0 %611
      %v614 = vmul.f32 %v597, %v612
      %616 = vrot.lane.b32.xlu0 %v614, 32
      %v617 = vpop.permute.xlu0 %616
      %s619 = scalar_lea.vmem %s210, %s543
      %620 = vst.msk [vmem:[%s619] sm:$0xff] %vm308, %v617
      %s621 = scalar_select %p290, 4, 3
      %s622 = smul.u32 %s621, 8
      %s623 = scalar_lea.vmem %s190, %s622
      %v624 = vld [vmem:[%s623] sm:$0xff]
      %v625 = vpack.c.bf16 %v614, %v614
      %627 = vrot.lane.b32.xlu0 %v625, 32
      %v628 = vpop.permute.xlu0 %627
      %v630 = vsel %vm308, %v628, 0
      %632 = vmatprep.subr.bf16.mxu0 0
      %633 = vmatpush1.bf16.msra.mxu0 0
      %634 = vmatprep.subr.bf16.mxu0 0
      %635 = vmatpush1.bf16.msra.mxu0 0
      %636 = vmatprep.subr.bf16.mxu0 0
      %637 = vmatpush1.bf16.msra.mxu0 0
      %638 = vmatprep.subr.bf16.mxu0 0
      %639 = vmatpush1.bf16.msra.mxu0 0
      %640 = vmatprep.subr.bf16.mxu0 0
      %641 = vmatpush1.bf16.msra.mxu0 0
      %642 = vmatprep.subr.bf16.mxu0 0
      %643 = vmatpush1.bf16.msra.mxu0 0
      %644 = vmatprep.subr.bf16.mxu0 0
      %645 = vmatpush1.bf16.msra.mxu0 %v305
      %646 = vmatprep.subr.bf16.mxu0 0
      %647 = vmatpush1.bf16.msra.mxu0 %v304
      %648 = vmatprep.subr.bf16.mxu0 0
      %649 = vmatpush2.bf16.msra.mxu0 0
      %650 = vmatprep.subr.bf16.mxu0 0
      %651 = vmatpush2.bf16.msra.mxu0 0
      %652 = vmatprep.subr.bf16.mxu0 0
      %653 = vmatpush2.bf16.msra.mxu0 0
      %654 = vmatprep.subr.bf16.mxu0 0
      %655 = vmatpush2.bf16.msra.mxu0 0
      %656 = vmatprep.subr.bf16.mxu0 0
      %657 = vmatpush2.bf16.msra.mxu0 0
      %658 = vmatprep.subr.bf16.mxu0 0
      %659 = vmatpush2.bf16.msra.mxu0 0
      %660 = vmatprep.subr.bf16.mxu0 0
      %661 = vmatpush2.bf16.msra.mxu0 0
      %662 = vmatprep.subr.bf16.mxu0 0
      %663 = vmatpush2.bf16.msra.mxu0 0
      %664 = vmatprep.mubr.bf16.mxu0 0
      %665 = vmatmul.mubr.bf16.gmra.mxu0 %v630
      %v666 = vpop.f32.mrf.mxu0
      %v667 = vadd.f32 0.0, %v666
      %v668 = vpop.f32.mrf.mxu0
      %v669 = vpop.f32.mrf.mxu0
      %v670 = vpop.f32.mrf.mxu0
      %671 = vdwg.mxu0
      %v672 = vadd.f32 %v624, %v667
      %v673 = vmul.f32 %v286, %v672
      %v674 = vtanh.pop %v673
      %v675 = vmul.f32 %v286, %v674
      %v676 = vadd.f32 %v675, %v287
      %v677 = vmul.f32 %v676, %v608
      %679 = vrot.lane.b32.xlu0 %v676, 64
      %v680 = vpop.permute.xlu0 %679
      %v682 = vmul.f32 %v676, %v680
      %684 = vrot.lane.b32.xlu0 %v682, 32
      %v685 = vpop.permute.xlu0 %684
      %v687 = vadd.f32 %v677, %v685
      %v688 = vtanh.pop %v687
      %690 = vrot.lane.b32.xlu0 %v688, 64
      %v691 = vpop.permute.xlu0 %690
      %v693 = vmul.f32 %v676, %v691
      %695 = vrot.lane.b32.xlu0 %v693, 32
      %v696 = vpop.permute.xlu0 %695
      %s698 = scalar_lea.vmem %s210, %s622
      %699 = vst.msk [vmem:[%s698] sm:$0xff] %vm308, %v696
      %s700 = scalar_select %p290, 5, 2
      %s701 = smul.u32 %s700, 8
      %s702 = scalar_lea.vmem %s190, %s701
      %v703 = vld [vmem:[%s702] sm:$0xff]
      %v704 = vpack.c.bf16 %v693, %v693
      %706 = vrot.lane.b32.xlu0 %v704, 32
      %v707 = vpop.permute.xlu0 %706
      %v709 = vsel %vm308, %v707, 0
      %711 = vmatprep.subr.bf16.mxu0 0
      %712 = vmatpush1.bf16.msra.mxu0 0
      %713 = vmatprep.subr.bf16.mxu0 0
      %714 = vmatpush1.bf16.msra.mxu0 0
      %715 = vmatprep.subr.bf16.mxu0 0
      %716 = vmatpush1.bf16.msra.mxu0 0
      %717 = vmatprep.subr.bf16.mxu0 0
      %718 = vmatpush1.bf16.msra.mxu0 0
      %719 = vmatprep.subr.bf16.mxu0 0
      %720 = vmatpush1.bf16.msra.mxu0 0
      %721 = vmatprep.subr.bf16.mxu0 0
      %722 = vmatpush1.bf16.msra.mxu0 0
      %723 = vmatprep.subr.bf16.mxu0 0
      %724 = vmatpush1.bf16.msra.mxu0 %v305
      %725 = vmatprep.subr.bf16.mxu0 0
      %726 = vmatpush1.bf16.msra.mxu0 %v304
      %727 = vmatprep.subr.bf16.mxu0 0
      %728 = vmatpush2.bf16.msra.mxu0 0
      %729 = vmatprep.subr.bf16.mxu0 0
      %730 = vmatpush2.bf16.msra.mxu0 0
      %731 = vmatprep.subr.bf16.mxu0 0
      %732 = vmatpush2.bf16.msra.mxu0 0
      %733 = vmatprep.subr.bf16.mxu0 0
      %734 = vmatpush2.bf16.msra.mxu0 0
      %735 = vmatprep.subr.bf16.mxu0 0
      %736 = vmatpush2.bf16.msra.mxu0 0
      %737 = vmatprep.subr.bf16.mxu0 0
      %738 = vmatpush2.bf16.msra.mxu0 0
      %739 = vmatprep.subr.bf16.mxu0 0
      %740 = vmatpush2.bf16.msra.mxu0 0
      %741 = vmatprep.subr.bf16.mxu0 0
      %742 = vmatpush2.bf16.msra.mxu0 0
      %743 = vmatprep.mubr.bf16.mxu0 0
      %744 = vmatmul.mubr.bf16.gmra.mxu0 %v709
      %v745 = vpop.f32.mrf.mxu0
      %v746 = vadd.f32 0.0, %v745
      %v747 = vpop.f32.mrf.mxu0
      %v748 = vpop.f32.mrf.mxu0
      %v749 = vpop.f32.mrf.mxu0
      %750 = vdwg.mxu0
      %v751 = vadd.f32 %v703, %v746
      %v752 = vmul.f32 %v286, %v751
      %v753 = vtanh.pop %v752
      %v754 = vmul.f32 %v286, %v753
      %v755 = vadd.f32 %v754, %v287
      %v756 = vmul.f32 %v755, %v687
      %758 = vrot.lane.b32.xlu0 %v755, 64
      %v759 = vpop.permute.xlu0 %758
      %v761 = vmul.f32 %v755, %v759
      %763 = vrot.lane.b32.xlu0 %v761, 32
      %v764 = vpop.permute.xlu0 %763
      %v766 = vadd.f32 %v756, %v764
      %v767 = vtanh.pop %v766
      %769 = vrot.lane.b32.xlu0 %v767, 64
      %v770 = vpop.permute.xlu0 %769
      %v772 = vmul.f32 %v755, %v770
      %774 = vrot.lane.b32.xlu0 %v772, 32
      %v775 = vpop.permute.xlu0 %774
      %s777 = scalar_lea.vmem %s210, %s701
      %778 = vst.msk [vmem:[%s777] sm:$0xff] %vm308, %v775
      %s779 = scalar_select %p290, 6, 1
      %s780 = smul.u32 %s779, 8
      %s781 = scalar_lea.vmem %s190, %s780
      %v782 = vld [vmem:[%s781] sm:$0xff]
      %v783 = vpack.c.bf16 %v772, %v772
      %785 = vrot.lane.b32.xlu0 %v783, 32
      %v786 = vpop.permute.xlu0 %785
      %v788 = vsel %vm308, %v786, 0
      %790 = vmatprep.subr.bf16.mxu0 0
      %791 = vmatpush1.bf16.msra.mxu0 0
      %792 = vmatprep.subr.bf16.mxu0 0
      %793 = vmatpush1.bf16.msra.mxu0 0
      %794 = vmatprep.subr.bf16.mxu0 0
      %795 = vmatpush1.bf16.msra.mxu0 0
      %796 = vmatprep.subr.bf16.mxu0 0
      %797 = vmatpush1.bf16.msra.mxu0 0
      %798 = vmatprep.subr.bf16.mxu0 0
      %799 = vmatpush1.bf16.msra.mxu0 0
      %800 = vmatprep.subr.bf16.mxu0 0
      %801 = vmatpush1.bf16.msra.mxu0 0
      %802 = vmatprep.subr.bf16.mxu0 0
      %803 = vmatpush1.bf16.msra.mxu0 %v305
      %804 = vmatprep.subr.bf16.mxu0 0
      %805 = vmatpush1.bf16.msra.mxu0 %v304
      %806 = vmatprep.subr.bf16.mxu0 0
      %807 = vmatpush2.bf16.msra.mxu0 0
      %808 = vmatprep.subr.bf16.mxu0 0
      %809 = vmatpush2.bf16.msra.mxu0 0
      %810 = vmatprep.subr.bf16.mxu0 0
      %811 = vmatpush2.bf16.msra.mxu0 0
      %812 = vmatprep.subr.bf16.mxu0 0
      %813 = vmatpush2.bf16.msra.mxu0 0
      %814 = vmatprep.subr.bf16.mxu0 0
      %815 = vmatpush2.bf16.msra.mxu0 0
      %816 = vmatprep.subr.bf16.mxu0 0
      %817 = vmatpush2.bf16.msra.mxu0 0
      %818 = vmatprep.subr.bf16.mxu0 0
      %819 = vmatpush2.bf16.msra.mxu0 0
      %820 = vmatprep.subr.bf16.mxu0 0
      %821 = vmatpush2.bf16.msra.mxu0 0
      %822 = vmatprep.mubr.bf16.mxu0 0
      %823 = vmatmul.mubr.bf16.gmra.mxu0 %v788
      %v824 = vpop.f32.mrf.mxu0
      %v825 = vadd.f32 0.0, %v824
      %v826 = vpop.f32.mrf.mxu0
      %v827 = vpop.f32.mrf.mxu0
      %v828 = vpop.f32.mrf.mxu0
      %829 = vdwg.mxu0
      %v830 = vadd.f32 %v782, %v825
      %v831 = vmul.f32 %v286, %v830
      %v832 = vtanh.pop %v831
      %v833 = vmul.f32 %v286, %v832
      %v834 = vadd.f32 %v833, %v287
      %v835 = vmul.f32 %v834, %v766
      %837 = vrot.lane.b32.xlu0 %v834, 64
      %v838 = vpop.permute.xlu0 %837
      %v840 = vmul.f32 %v834, %v838
      %842 = vrot.lane.b32.xlu0 %v840, 32
      %v843 = vpop.permute.xlu0 %842
      %v845 = vadd.f32 %v835, %v843
      %v846 = vtanh.pop %v845
      %848 = vrot.lane.b32.xlu0 %v846, 64
      %v849 = vpop.permute.xlu0 %848
      %v851 = vmul.f32 %v834, %v849
      %853 = vrot.lane.b32.xlu0 %v851, 32
      %v854 = vpop.permute.xlu0 %853
      %s856 = scalar_lea.vmem %s210, %s780
      %857 = vst.msk [vmem:[%s856] sm:$0xff] %vm308, %v854
      %s858 = scalar_select %p290, 7, 0
      %s859 = smul.u32 %s858, 8
      %s860 = scalar_lea.vmem %s190, %s859
      %v861 = vld [vmem:[%s860] sm:$0xff]
      %v862 = vpack.c.bf16 %v851, %v851
      %864 = vrot.lane.b32.xlu0 %v862, 32
      %v865 = vpop.permute.xlu0 %864
      %v867 = vsel %vm308, %v865, 0
      %869 = vmatprep.subr.bf16.mxu0 0
      %870 = vmatpush1.bf16.msra.mxu0 0
      %871 = vmatprep.subr.bf16.mxu0 0
      %872 = vmatpush1.bf16.msra.mxu0 0
      %873 = vmatprep.subr.bf16.mxu0 0
      %874 = vmatpush1.bf16.msra.mxu0 0
      %875 = vmatprep.subr.bf16.mxu0 0
      %876 = vmatpush1.bf16.msra.mxu0 0
      %877 = vmatprep.subr.bf16.mxu0 0
      %878 = vmatpush1.bf16.msra.mxu0 0
      %879 = vmatprep.subr.bf16.mxu0 0
      %880 = vmatpush1.bf16.msra.mxu0 0
      %881 = vmatprep.subr.bf16.mxu0 0
      %882 = vmatpush1.bf16.msra.mxu0 %v305
      %883 = vmatprep.subr.bf16.mxu0 0
      %884 = vmatpush1.bf16.msra.mxu0 %v304
      %885 = vmatprep.subr.bf16.mxu0 0
      %886 = vmatpush2.bf16.msra.mxu0 0
      %887 = vmatprep.subr.bf16.mxu0 0
      %888 = vmatpush2.bf16.msra.mxu0 0
      %889 = vmatprep.subr.bf16.mxu0 0
      %890 = vmatpush2.bf16.msra.mxu0 0
      %891 = vmatprep.subr.bf16.mxu0 0
      %892 = vmatpush2.bf16.msra.mxu0 0
      %893 = vmatprep.subr.bf16.mxu0 0
      %894 = vmatpush2.bf16.msra.mxu0 0
      %895 = vmatprep.subr.bf16.mxu0 0
      %896 = vmatpush2.bf16.msra.mxu0 0
      %897 = vmatprep.subr.bf16.mxu0 0
      %898 = vmatpush2.bf16.msra.mxu0 0
      %899 = vmatprep.subr.bf16.mxu0 0
      %900 = vmatpush2.bf16.msra.mxu0 0
      %901 = vmatprep.mubr.bf16.mxu0 0
      %902 = vmatmul.mubr.bf16.gmra.mxu0 %v867
      %v903 = vpop.f32.mrf.mxu0
      %v904 = vadd.f32 0.0, %v903
      %v905 = vpop.f32.mrf.mxu0
      %v906 = vpop.f32.mrf.mxu0
      %v907 = vpop.f32.mrf.mxu0
      %908 = vdwg.mxu0
      %v909 = vadd.f32 %v861, %v904
      %v910 = vmul.f32 %v286, %v909
      %v911 = vtanh.pop %v910
      %v912 = vmul.f32 %v286, %v911
      %v913 = vadd.f32 %v912, %v287
      %v914 = vmul.f32 %v913, %v845
      %916 = vrot.lane.b32.xlu0 %v913, 64
      %v917 = vpop.permute.xlu0 %916
      %v919 = vmul.f32 %v913, %v917
      %921 = vrot.lane.b32.xlu0 %v919, 32
      %v922 = vpop.permute.xlu0 %921
      %v924 = vadd.f32 %v914, %v922
      %v925 = vtanh.pop %v924
      %927 = vrot.lane.b32.xlu0 %v925, 64
      %v928 = vpop.permute.xlu0 %927
      %v930 = vmul.f32 %v913, %v928
      %932 = vrot.lane.b32.xlu0 %v930, 32
      %v933 = vpop.permute.xlu0 %932
      %s935 = scalar_lea.vmem %s210, %s859
      %936 = vst.msk [vmem:[%s935] sm:$0xff] %vm308, %v933
      %937 = vst.msk [vmem:[#allocation4] sm:$0xff] %vm308, %v933
      %939 = vrot.lane.b32.xlu0 %v924, 96
      %v940 = vpop.permute.xlu0 %939
      %942 = vst.msk [vmem:[#allocation5] sm:$0xff] %vm308, %v940
      %s943 = ssub.s32 1, %s17
      %s944 = smul.u32 %s943, %s18
      %s945 = ssub.s32 0, %s18
      %s946 = smul.u32 %s17, %s945
      %s947 = sadd.s32 %s944, %s946
      %s948 = smul.u32 8, %s947
      %p949 = scmp.lt.s32.totalorder %s17, 1
      %s950 = scalar_select %p949, %s17, 1
      %p951 = scmp.lt.s32.totalorder %s948, 7
      %s952 = scalar_select %p951, %s948, 7
      %s953 = smul.addr %s950, 8
      %s954 = sadd.s32 %s952, %s953
      %s955 = smul.addr %s954, 8
      %s956 = scalar_lea.vmem %s2, %s955
      // Predicated region
      $region63: #{muff_ner_forward.2} parent=23 // pred_check
        %p957 = pneg %p93
      $region64: #{muff_ner_forward.2} parent=23 // pred_check_branch
        %959 = sbr.rel (%p957) target = $region66
      $region65: #{muff_ner_forward.2} parent=23 // pred_region
        %s960 = ssub.s32 1, %s17
        %s961 = smul.u32 %s960, %s18
        %s962 = ssub.s32 0, %s18
        %s963 = smul.u32 %s17, %s962
        %s964 = sadd.s32 %s961, %s963
        %s965 = smul.u32 8, %s964
      $region66: #{muff_ner_forward.2} parent=23 // pred_fallthru
        _
    $region24: #{muff_ner_forward.2} parent=5 // pred_fallthru
      _
    %p966 = scmp.le.s32.totalorder 2, %s8
    // Predicated region
    $region67: #{muff_ner_forward.2} parent=5 // pred_check
      %p967 = pneg %p966
    $region68: #{muff_ner_forward.2} parent=5 // pred_check_branch
      %969 = sbr.rel (%p967) target = $region70
    $region69: #{muff_ner_forward.2} parent=5 // pred_region
      %s970 = ssub.s32 %s8, 2
      // Predicated region
      $region71: #{muff_ner_forward.2} parent=69 // pred_check
        %p971 = pneg %p99
      $region72: #{muff_ner_forward.2} parent=69 // pred_check_branch
        %973 = sbr.rel (%p971) target = $region74
      $region73: #{muff_ner_forward.2} parent=69 // pred_region
        %s974 = ssub.s32 1, %s19
        %s975 = smul.u32 %s974, %s20
        %s976 = ssub.s32 0, %s20
        %s977 = smul.u32 %s19, %s976
        %s978 = sadd.s32 %s975, %s977
        %s979 = smul.u32 8, %s978
        %p980 = scmp.lt.s32.totalorder %s19, 1
        %s981 = scalar_select %p980, %s19, 1
        %p982 = scmp.lt.s32.totalorder %s979, 7
        %s983 = scalar_select %p982, %s979, 7
        %s984 = smul.addr %s981, 8
        %s985 = sadd.s32 %s983, %s984
        %s986 = smul.addr %s985, 8
        %s987 = scalar_lea.vmem %s2, %s986
      $region74: #{muff_ner_forward.2} parent=69 // pred_fallthru
        _
    $region70: #{muff_ner_forward.2} parent=5 // pred_fallthru
      _
  $region6: #{muff_ner_forward.2} parent=0 // loop_footer
    %s12 = sadd.s32 1, %s8
  $region7: #{muff_ner_forward.2} parent=0 // loop_footer_branch
    %7 = sbr.rel target = $region3
  $region8: #{muff_ner_forward.2} parent=0 // loop_exit
    _
  %988 = vsyncmov [#allocation3]
  %s989 = vpop.sfrf %988
  %p990 = scmp.eq.s32.totalorder %s989, 0
  %p991 = pneg %p990
  %993 = shalt.err (%p991)

</llo_original>
